<compile_context>
chip_gen: v7x
topology: tpu7x:2x2x1
jax: 0.10.0
libtpu: 0.0.40
codegen_flags: <defaults>
</compile_context>

<pallas_src>
import jax
import jax.numpy as jnp
from jax import lax
from jax.experimental import pallas as pl
from jax.experimental.pallas import tpu as pltpu


def lstm_reg_kernel(x_ref, w_ih_ref, w_hh_ref, b_ref, w_reg_ref, b_reg_ref,
                    out_ref, gx_sc, hs_sc):
    S = x_ref.shape[0]
    Hp = w_hh_ref.shape[0]          # lane-aligned (padded) hidden size

    # ---- Prologue: batched input projection for all timesteps at once ------
    # (S, I) @ (I, 4*Hp) + b  ->  (S, 4*Hp). One big MXU matmul instead of S
    # tiny M=1 matmuls on the serial path; combined bias folded in here.
    gx_sc[...] = (jnp.dot(x_ref[...], w_ih_ref[...],
                          preferred_element_type=jnp.float32)
                  + b_ref[...])

    # Keep the recurrent weights resident in vregs across the whole loop.
    w_hh = w_hh_ref[...]            # (Hp, 4*Hp)

    # ---- Sequential recurrence (inherently serial over time) ---------------
    def step(t, carry):
        h, c = carry                                            # (1, Hp) each
        gates = (jnp.dot(h, w_hh, preferred_element_type=jnp.float32)
                 + gx_sc[pl.ds(t, 1), :])                       # (1, 4*Hp)
        # PyTorch gate order [i, f, g, o]; each slice is exactly Hp=128 lanes
        # wide at a 128-lane-aligned offset -> no cross-lane work.
        i_g = jax.nn.sigmoid(gates[:, 0 * Hp:1 * Hp])
        f_g = jax.nn.sigmoid(gates[:, 1 * Hp:2 * Hp])
        g_g = jnp.tanh(gates[:, 2 * Hp:3 * Hp])
        o_g = jax.nn.sigmoid(gates[:, 3 * Hp:4 * Hp])
        c_new = f_g * c + i_g * g_g
        h_new = o_g * jnp.tanh(c_new)
        hs_sc[pl.ds(t, 1), :] = h_new
        return (h_new, c_new)

    h0 = jnp.zeros((1, Hp), jnp.float32)    # PyTorch default zero init state
    c0 = jnp.zeros((1, Hp), jnp.float32)
    lax.fori_loop(0, S, step, (h0, c0), unroll=True)

    # ---- Epilogue: regression head over all hidden states at once ----------
    out_ref[...] = (jnp.dot(hs_sc[...], w_reg_ref[...],
                            preferred_element_type=jnp.float32)
                    + b_reg_ref[...])


def _pad_gate_rows(a, H, Hp):
    """Pad each of the 4 PyTorch gate blocks [i, f, g, o] along axis 0: H -> Hp."""
    a4 = a.reshape(4, H, *a.shape[1:])
    pad = [(0, 0)] * a4.ndim
    pad[1] = (0, Hp - H)
    return jnp.pad(a4, pad).reshape(4 * Hp, *a.shape[1:])


def lstm_reg_forward(seq, params):
    """seq: (S, input_size) float32 (== seq.view(len(seq), 1, -1) flattened).
    Returns (S, 1, output_size), matching the PyTorch module output."""
    w_ih, w_hh, b_ih, b_hh, w_reg, b_reg = params
    S, I = seq.shape
    H = w_hh.shape[1]
    O = w_reg.shape[0]
    Hp = max(128, ((H + 127) // 128) * 128)   # lane-align the hidden dim

    w_ih = jnp.asarray(w_ih, jnp.float32)
    w_hh = jnp.asarray(w_hh, jnp.float32)
    b_all = jnp.asarray(b_ih, jnp.float32) + jnp.asarray(b_hh, jnp.float32)
    w_reg = jnp.asarray(w_reg, jnp.float32)
    b_reg = jnp.asarray(b_reg, jnp.float32)

    # Zero-pad per-gate blocks to the lane-aligned hidden size (exact: padded
    # gate pre-activations are 0 -> padded c stays 0 -> padded h stays 0).
    w_ih_p = _pad_gate_rows(w_ih, H, Hp)                          # (4Hp, I)
    w_hh_p = _pad_gate_rows(w_hh, H, Hp)                          # (4Hp, H)
    w_hh_p = jnp.pad(w_hh_p, ((0, 0), (0, Hp - H)))               # (4Hp, Hp)
    b_p = _pad_gate_rows(b_all, H, Hp)                            # (4Hp,)
    w_reg_p = jnp.pad(w_reg, ((0, 0), (0, Hp - H)))               # (O, Hp)

    # Pre-transpose so the kernel does row-major (M, K) @ (K, N) matmuls.
    w_ih_t = w_ih_p.T                         # (I, 4Hp)
    w_hh_t = w_hh_p.T                         # (Hp, 4Hp)
    b_2d = b_p[None, :]                       # (1, 4Hp)
    w_reg_t = w_reg_p.T                       # (Hp, O)
    b_reg_2d = b_reg[None, :]                 # (1, O)

    vmem = pl.BlockSpec(memory_space=pltpu.MemorySpace.VMEM)
    out = pl.pallas_call(
        lstm_reg_kernel,
        out_shape=jax.ShapeDtypeStruct((S, O), jnp.float32),
        in_specs=[vmem] * 6,
        out_specs=vmem,
        scratch_shapes=[
            pltpu.VMEM((S, 4 * Hp), jnp.float32),   # gates_x for all timesteps
            pltpu.VMEM((S, Hp), jnp.float32),       # hidden states for all timesteps
        ],
    )(seq.astype(jnp.float32), w_ih_t, w_hh_t, b_2d, w_reg_t, b_reg_2d)

    return out.reshape(S, 1, O)


def lstm_reg_reference(seq, params):
    """Pure-JAX reference (mirrors PyTorch nn.LSTM + nn.Linear semantics)."""
    w_ih, w_hh, b_ih, b_hh, w_reg, b_reg = params
    H = w_hh.shape[1]

    def step(carry, x_t):
        h, c = carry
        gates = x_t @ w_ih.T + b_ih + h @ w_hh.T + b_hh
        i_g = jax.nn.sigmoid(gates[0:H])
        f_g = jax.nn.sigmoid(gates[H:2 * H])
        g_g = jnp.tanh(gates[2 * H:3 * H])
        o_g = jax.nn.sigmoid(gates[3 * H:4 * H])
        c_new = f_g * c + i_g * g_g
        h_new = o_g * jnp.tanh(c_new)
        return (h_new, c_new), h_new

    h0 = jnp.zeros((H,), jnp.float32)
    c0 = jnp.zeros((H,), jnp.float32)
    _, hs = jax.lax.scan(step, (h0, c0), seq.astype(jnp.float32))
    out = hs @ w_reg.T + b_reg
    return out[:, None, :]


if __name__ == "__main__":
    # Small shapes consistent with the module's forward: seq of (S, input_size).
    S = 8
    INPUT_SIZE = 16
    HIDDEN = 32
    OUTPUT = 1

    key = jax.random.PRNGKey(0)
    k_x, k1, k2, k3, k4, k5, k6 = jax.random.split(key, 7)

    # Deterministic parameter init, uniform(-1/sqrt(H), 1/sqrt(H)) like PyTorch.
    bound = 1.0 / jnp.sqrt(jnp.float32(HIDDEN))
    w_ih = jax.random.uniform(k1, (4 * HIDDEN, INPUT_SIZE), jnp.float32, -bound, bound)
    w_hh = jax.random.uniform(k2, (4 * HIDDEN, HIDDEN), jnp.float32, -bound, bound)
    b_ih = jax.random.uniform(k3, (4 * HIDDEN,), jnp.float32, -bound, bound)
    b_hh = jax.random.uniform(k4, (4 * HIDDEN,), jnp.float32, -bound, bound)
    w_reg = jax.random.uniform(k5, (OUTPUT, HIDDEN), jnp.float32, -bound, bound)
    b_reg = jax.random.uniform(k6, (OUTPUT,), jnp.float32, -bound, bound)
    params = (w_ih, w_hh, b_ih, b_hh, w_reg, b_reg)

    seq = jax.random.normal(k_x, (S, INPUT_SIZE), jnp.float32)

    out = lstm_reg_forward(seq, params)
    out = jax.block_until_ready(out)

    ref = jax.block_until_ready(lstm_reg_reference(seq, params))
    assert out.shape == (S, 1, OUTPUT)
    assert jnp.allclose(out, ref, atol=1e-5, rtol=1e-5), "mismatch vs reference"

    print("KERNEL_OK")
</pallas_src>

<mosaic_0001>
module attributes {stable_mosaic.version = 11 : i64} {
  func.func @lstm_reg_kernel(%arg0: memref<8x16xf32, #tpu.memory_space<vmem>>, %arg1: memref<16x512xf32, #tpu.memory_space<vmem>>, %arg2: memref<128x512xf32, #tpu.memory_space<vmem>>, %arg3: memref<1x512xf32, #tpu.memory_space<vmem>>, %arg4: memref<128x1xf32, #tpu.memory_space<vmem>>, %arg5: memref<1x1xf32, #tpu.memory_space<vmem>>, %arg6: memref<8x1xf32, #tpu.memory_space<vmem>>, %arg7: memref<8x512xf32, #tpu.memory_space<vmem>>, %arg8: memref<8x128xf32, #tpu.memory_space<vmem>>) attributes {dimension_semantics = [], scalar_prefetch = 0 : i64, scratch_operands = 2 : i64, tpu.core_type = #tpu.core_type<tc>} {
    %c0 = arith.constant 0 : index
    %c0_0 = arith.constant 0 : index
    %0 = vector.load %arg0[%c0, %c0_0] : memref<8x16xf32, #tpu.memory_space<vmem>>, vector<8x16xf32>
    %c0_1 = arith.constant 0 : index
    %c0_2 = arith.constant 0 : index
    %1 = vector.load %arg1[%c0_1, %c0_2] : memref<16x512xf32, #tpu.memory_space<vmem>>, vector<16x512xf32>
    %cst = arith.constant dense<0.000000e+00> : vector<8x512xf32>
    %2 = tpu.matmul %0, %1, %cst {dimension_numbers = #tpu.dot_dimension_numbers<[1], [0], [0], [1], [0, 0, 1, 1], [], []>} : vector<8x16xf32>, vector<16x512xf32>, vector<8x512xf32> -> vector<8x512xf32>
    %c0_3 = arith.constant 0 : index
    %c0_4 = arith.constant 0 : index
    %3 = vector.load %arg3[%c0_3, %c0_4] : memref<1x512xf32, #tpu.memory_space<vmem>>, vector<1x512xf32>
    %4 = vector.broadcast %3 : vector<1x512xf32> to vector<8x512xf32>
    %5 = arith.addf %2, %4 : vector<8x512xf32>
    %c0_5 = arith.constant 0 : index
    %c0_6 = arith.constant 0 : index
    %6 = vector.load %arg7[%c0_5, %c0_6] : memref<8x512xf32, #tpu.memory_space<vmem>>, vector<8x512xf32>
    tpu.vector_store %arg7[%c0_5, %c0_6], %5 {strides = array<i32>} : memref<8x512xf32, #tpu.memory_space<vmem>>, vector<8x512xf32>,
    %c0_7 = arith.constant 0 : index
    %c0_8 = arith.constant 0 : index
    %7 = vector.load %arg2[%c0_7, %c0_8] : memref<128x512xf32, #tpu.memory_space<vmem>>, vector<128x512xf32>
    %cst_9 = arith.constant 0.000000e+00 : f32
    %8 = vector.broadcast %cst_9 : f32 to vector<1x128xf32>
    %cst_10 = arith.constant 0.000000e+00 : f32
    %9 = vector.broadcast %cst_10 : f32 to vector<1x128xf32>
    %c0_i32 = arith.constant 0 : i32
    %cst_11 = arith.constant dense<0.000000e+00> : vector<1x512xf32>
    %10 = tpu.matmul %8, %7, %cst_11 {dimension_numbers = #tpu.dot_dimension_numbers<[1], [0], [0], [1], [0, 0, 1, 1], [], []>} : vector<1x128xf32>, vector<128x512xf32>, vector<1x512xf32> -> vector<1x512xf32>
    %11 = arith.index_cast %c0_i32 : i32 to index
    %c0_12 = arith.constant 0 : index
    %12 = vector.load %arg7[%11, %c0_12] : memref<8x512xf32, #tpu.memory_space<vmem>>, vector<1x512xf32>
    %13 = arith.addf %10, %12 : vector<1x512xf32>
    %14 = vector.extract_strided_slice %13 {offsets = [0, 0], sizes = [1, 128], strides = [1, 1]} : vector<1x512xf32> to vector<1x128xf32>
    %15 = arith.negf %14 : vector<1x128xf32>
    %16 = math.exp %15 : vector<1x128xf32>
    %cst_13 = arith.constant 1.000000e+00 : f32
    %17 = vector.broadcast %cst_13 : f32 to vector<1x128xf32>
    %18 = arith.addf %17, %16 : vector<1x128xf32>
    %19 = arith.divf %17, %18 : vector<1x128xf32>
    %20 = vector.extract_strided_slice %13 {offsets = [0, 128], sizes = [1, 128], strides = [1, 1]} : vector<1x512xf32> to vector<1x128xf32>
    %21 = arith.negf %20 : vector<1x128xf32>
    %22 = math.exp %21 : vector<1x128xf32>
    %cst_14 = arith.constant 1.000000e+00 : f32
    %23 = vector.broadcast %cst_14 : f32 to vector<1x128xf32>
    %24 = arith.addf %23, %22 : vector<1x128xf32>
    %25 = arith.divf %23, %24 : vector<1x128xf32>
    %26 = vector.extract_strided_slice %13 {offsets = [0, 256], sizes = [1, 128], strides = [1, 1]} : vector<1x512xf32> to vector<1x128xf32>
    %27 = math.tanh %26 : vector<1x128xf32>
    %28 = vector.extract_strided_slice %13 {offsets = [0, 384], sizes = [1, 128], strides = [1, 1]} : vector<1x512xf32> to vector<1x128xf32>
    %29 = arith.negf %28 : vector<1x128xf32>
    %30 = math.exp %29 : vector<1x128xf32>
    %cst_15 = arith.constant 1.000000e+00 : f32
    %31 = vector.broadcast %cst_15 : f32 to vector<1x128xf32>
    %32 = arith.addf %31, %30 : vector<1x128xf32>
    %33 = arith.divf %31, %32 : vector<1x128xf32>
    %34 = arith.mulf %25, %9 : vector<1x128xf32>
    %35 = arith.mulf %19, %27 : vector<1x128xf32>
    %36 = arith.addf %34, %35 : vector<1x128xf32>
    %37 = math.tanh %36 : vector<1x128xf32>
    %38 = arith.mulf %33, %37 : vector<1x128xf32>
    %39 = arith.index_cast %c0_i32 : i32 to index
    %c0_16 = arith.constant 0 : index
    %40 = vector.load %arg8[%39, %c0_16] : memref<8x128xf32, #tpu.memory_space<vmem>>, vector<1x128xf32>
    tpu.vector_store %arg8[%39, %c0_16], %38 {strides = array<i32>} : memref<8x128xf32, #tpu.memory_space<vmem>>, vector<1x128xf32>,
    %c1_i32 = arith.constant 1 : i32
    %cst_17 = arith.constant dense<0.000000e+00> : vector<1x512xf32>
    %41 = tpu.matmul %38, %7, %cst_17 {dimension_numbers = #tpu.dot_dimension_numbers<[1], [0], [0], [1], [0, 0, 1, 1], [], []>} : vector<1x128xf32>, vector<128x512xf32>, vector<1x512xf32> -> vector<1x512xf32>
    %42 = arith.index_cast %c1_i32 : i32 to index
    %c0_18 = arith.constant 0 : index
    %43 = vector.load %arg7[%42, %c0_18] : memref<8x512xf32, #tpu.memory_space<vmem>>, vector<1x512xf32>
    %44 = arith.addf %41, %43 : vector<1x512xf32>
    %45 = vector.extract_strided_slice %44 {offsets = [0, 0], sizes = [1, 128], strides = [1, 1]} : vector<1x512xf32> to vector<1x128xf32>
    %46 = arith.negf %45 : vector<1x128xf32>
    %47 = math.exp %46 : vector<1x128xf32>
    %cst_19 = arith.constant 1.000000e+00 : f32
    %48 = vector.broadcast %cst_19 : f32 to vector<1x128xf32>
    %49 = arith.addf %48, %47 : vector<1x128xf32>
    %50 = arith.divf %48, %49 : vector<1x128xf32>
    %51 = vector.extract_strided_slice %44 {offsets = [0, 128], sizes = [1, 128], strides = [1, 1]} : vector<1x512xf32> to vector<1x128xf32>
    %52 = arith.negf %51 : vector<1x128xf32>
    %53 = math.exp %52 : vector<1x128xf32>
    %cst_20 = arith.constant 1.000000e+00 : f32
    %54 = vector.broadcast %cst_20 : f32 to vector<1x128xf32>
    %55 = arith.addf %54, %53 : vector<1x128xf32>
    %56 = arith.divf %54, %55 : vector<1x128xf32>
    %57 = vector.extract_strided_slice %44 {offsets = [0, 256], sizes = [1, 128], strides = [1, 1]} : vector<1x512xf32> to vector<1x128xf32>
    %58 = math.tanh %57 : vector<1x128xf32>
    %59 = vector.extract_strided_slice %44 {offsets = [0, 384], sizes = [1, 128], strides = [1, 1]} : vector<1x512xf32> to vector<1x128xf32>
    %60 = arith.negf %59 : vector<1x128xf32>
    %61 = math.exp %60 : vector<1x128xf32>
    %cst_21 = arith.constant 1.000000e+00 : f32
    %62 = vector.broadcast %cst_21 : f32 to vector<1x128xf32>
    %63 = arith.addf %62, %61 : vector<1x128xf32>
    %64 = arith.divf %62, %63 : vector<1x128xf32>
    %65 = arith.mulf %56, %36 : vector<1x128xf32>
    %66 = arith.mulf %50, %58 : vector<1x128xf32>
    %67 = arith.addf %65, %66 : vector<1x128xf32>
    %68 = math.tanh %67 : vector<1x128xf32>
    %69 = arith.mulf %64, %68 : vector<1x128xf32>
    %70 = arith.index_cast %c1_i32 : i32 to index
    %c0_22 = arith.constant 0 : index
    %71 = vector.load %arg8[%70, %c0_22] : memref<8x128xf32, #tpu.memory_space<vmem>>, vector<1x128xf32>
    tpu.vector_store %arg8[%70, %c0_22], %69 {strides = array<i32>} : memref<8x128xf32, #tpu.memory_space<vmem>>, vector<1x128xf32>,
    %c2_i32 = arith.constant 2 : i32
    %cst_23 = arith.constant dense<0.000000e+00> : vector<1x512xf32>
    %72 = tpu.matmul %69, %7, %cst_23 {dimension_numbers = #tpu.dot_dimension_numbers<[1], [0], [0], [1], [0, 0, 1, 1], [], []>} : vector<1x128xf32>, vector<128x512xf32>, vector<1x512xf32> -> vector<1x512xf32>
    %73 = arith.index_cast %c2_i32 : i32 to index
    %c0_24 = arith.constant 0 : index
    %74 = vector.load %arg7[%73, %c0_24] : memref<8x512xf32, #tpu.memory_space<vmem>>, vector<1x512xf32>
    %75 = arith.addf %72, %74 : vector<1x512xf32>
    %76 = vector.extract_strided_slice %75 {offsets = [0, 0], sizes = [1, 128], strides = [1, 1]} : vector<1x512xf32> to vector<1x128xf32>
    %77 = arith.negf %76 : vector<1x128xf32>
    %78 = math.exp %77 : vector<1x128xf32>
    %cst_25 = arith.constant 1.000000e+00 : f32
    %79 = vector.broadcast %cst_25 : f32 to vector<1x128xf32>
    %80 = arith.addf %79, %78 : vector<1x128xf32>
    %81 = arith.divf %79, %80 : vector<1x128xf32>
    %82 = vector.extract_strided_slice %75 {offsets = [0, 128], sizes = [1, 128], strides = [1, 1]} : vector<1x512xf32> to vector<1x128xf32>
    %83 = arith.negf %82 : vector<1x128xf32>
    %84 = math.exp %83 : vector<1x128xf32>
    %cst_26 = arith.constant 1.000000e+00 : f32
    %85 = vector.broadcast %cst_26 : f32 to vector<1x128xf32>
    %86 = arith.addf %85, %84 : vector<1x128xf32>
    %87 = arith.divf %85, %86 : vector<1x128xf32>
    %88 = vector.extract_strided_slice %75 {offsets = [0, 256], sizes = [1, 128], strides = [1, 1]} : vector<1x512xf32> to vector<1x128xf32>
    %89 = math.tanh %88 : vector<1x128xf32>
    %90 = vector.extract_strided_slice %75 {offsets = [0, 384], sizes = [1, 128], strides = [1, 1]} : vector<1x512xf32> to vector<1x128xf32>
    %91 = arith.negf %90 : vector<1x128xf32>
    %92 = math.exp %91 : vector<1x128xf32>
    %cst_27 = arith.constant 1.000000e+00 : f32
    %93 = vector.broadcast %cst_27 : f32 to vector<1x128xf32>
    %94 = arith.addf %93, %92 : vector<1x128xf32>
    %95 = arith.divf %93, %94 : vector<1x128xf32>
    %96 = arith.mulf %87, %67 : vector<1x128xf32>
    %97 = arith.mulf %81, %89 : vector<1x128xf32>
    %98 = arith.addf %96, %97 : vector<1x128xf32>
    %99 = math.tanh %98 : vector<1x128xf32>
    %100 = arith.mulf %95, %99 : vector<1x128xf32>
    %101 = arith.index_cast %c2_i32 : i32 to index
    %c0_28 = arith.constant 0 : index
    %102 = vector.load %arg8[%101, %c0_28] : memref<8x128xf32, #tpu.memory_space<vmem>>, vector<1x128xf32>
    tpu.vector_store %arg8[%101, %c0_28], %100 {strides = array<i32>} : memref<8x128xf32, #tpu.memory_space<vmem>>, vector<1x128xf32>,
    %c3_i32 = arith.constant 3 : i32
    %cst_29 = arith.constant dense<0.000000e+00> : vector<1x512xf32>
    %103 = tpu.matmul %100, %7, %cst_29 {dimension_numbers = #tpu.dot_dimension_numbers<[1], [0], [0], [1], [0, 0, 1, 1], [], []>} : vector<1x128xf32>, vector<128x512xf32>, vector<1x512xf32> -> vector<1x512xf32>
    %104 = arith.index_cast %c3_i32 : i32 to index
    %c0_30 = arith.constant 0 : index
    %105 = vector.load %arg7[%104, %c0_30] : memref<8x512xf32, #tpu.memory_space<vmem>>, vector<1x512xf32>
    %106 = arith.addf %103, %105 : vector<1x512xf32>
    %107 = vector.extract_strided_slice %106 {offsets = [0, 0], sizes = [1, 128], strides = [1, 1]} : vector<1x512xf32> to vector<1x128xf32>
    %108 = arith.negf %107 : vector<1x128xf32>
    %109 = math.exp %108 : vector<1x128xf32>
    %cst_31 = arith.constant 1.000000e+00 : f32
    %110 = vector.broadcast %cst_31 : f32 to vector<1x128xf32>
    %111 = arith.addf %110, %109 : vector<1x128xf32>
    %112 = arith.divf %110, %111 : vector<1x128xf32>
    %113 = vector.extract_strided_slice %106 {offsets = [0, 128], sizes = [1, 128], strides = [1, 1]} : vector<1x512xf32> to vector<1x128xf32>
    %114 = arith.negf %113 : vector<1x128xf32>
    %115 = math.exp %114 : vector<1x128xf32>
    %cst_32 = arith.constant 1.000000e+00 : f32
    %116 = vector.broadcast %cst_32 : f32 to vector<1x128xf32>
    %117 = arith.addf %116, %115 : vector<1x128xf32>
    %118 = arith.divf %116, %117 : vector<1x128xf32>
    %119 = vector.extract_strided_slice %106 {offsets = [0, 256], sizes = [1, 128], strides = [1, 1]} : vector<1x512xf32> to vector<1x128xf32>
    %120 = math.tanh %119 : vector<1x128xf32>
    %121 = vector.extract_strided_slice %106 {offsets = [0, 384], sizes = [1, 128], strides = [1, 1]} : vector<1x512xf32> to vector<1x128xf32>
    %122 = arith.negf %121 : vector<1x128xf32>
    %123 = math.exp %122 : vector<1x128xf32>
    %cst_33 = arith.constant 1.000000e+00 : f32
    %124 = vector.broadcast %cst_33 : f32 to vector<1x128xf32>
    %125 = arith.addf %124, %123 : vector<1x128xf32>
    %126 = arith.divf %124, %125 : vector<1x128xf32>
    %127 = arith.mulf %118, %98 : vector<1x128xf32>
    %128 = arith.mulf %112, %120 : vector<1x128xf32>
    %129 = arith.addf %127, %128 : vector<1x128xf32>
    %130 = math.tanh %129 : vector<1x128xf32>
    %131 = arith.mulf %126, %130 : vector<1x128xf32>
    %132 = arith.index_cast %c3_i32 : i32 to index
    %c0_34 = arith.constant 0 : index
    %133 = vector.load %arg8[%132, %c0_34] : memref<8x128xf32, #tpu.memory_space<vmem>>, vector<1x128xf32>
    tpu.vector_store %arg8[%132, %c0_34], %131 {strides = array<i32>} : memref<8x128xf32, #tpu.memory_space<vmem>>, vector<1x128xf32>,
    %c4_i32 = arith.constant 4 : i32
    %cst_35 = arith.constant dense<0.000000e+00> : vector<1x512xf32>
    %134 = tpu.matmul %131, %7, %cst_35 {dimension_numbers = #tpu.dot_dimension_numbers<[1], [0], [0], [1], [0, 0, 1, 1], [], []>} : vector<1x128xf32>, vector<128x512xf32>, vector<1x512xf32> -> vector<1x512xf32>
    %135 = arith.index_cast %c4_i32 : i32 to index
    %c0_36 = arith.constant 0 : index
    %136 = vector.load %arg7[%135, %c0_36] : memref<8x512xf32, #tpu.memory_space<vmem>>, vector<1x512xf32>
    %137 = arith.addf %134, %136 : vector<1x512xf32>
    %138 = vector.extract_strided_slice %137 {offsets = [0, 0], sizes = [1, 128], strides = [1, 1]} : vector<1x512xf32> to vector<1x128xf32>
    %139 = arith.negf %138 : vector<1x128xf32>
    %140 = math.exp %139 : vector<1x128xf32>
    %cst_37 = arith.constant 1.000000e+00 : f32
    %141 = vector.broadcast %cst_37 : f32 to vector<1x128xf32>
    %142 = arith.addf %141, %140 : vector<1x128xf32>
    %143 = arith.divf %141, %142 : vector<1x128xf32>
    %144 = vector.extract_strided_slice %137 {offsets = [0, 128], sizes = [1, 128], strides = [1, 1]} : vector<1x512xf32> to vector<1x128xf32>
    %145 = arith.negf %144 : vector<1x128xf32>
    %146 = math.exp %145 : vector<1x128xf32>
    %cst_38 = arith.constant 1.000000e+00 : f32
    %147 = vector.broadcast %cst_38 : f32 to vector<1x128xf32>
    %148 = arith.addf %147, %146 : vector<1x128xf32>
    %149 = arith.divf %147, %148 : vector<1x128xf32>
    %150 = vector.extract_strided_slice %137 {offsets = [0, 256], sizes = [1, 128], strides = [1, 1]} : vector<1x512xf32> to vector<1x128xf32>
    %151 = math.tanh %150 : vector<1x128xf32>
    %152 = vector.extract_strided_slice %137 {offsets = [0, 384], sizes = [1, 128], strides = [1, 1]} : vector<1x512xf32> to vector<1x128xf32>
    %153 = arith.negf %152 : vector<1x128xf32>
    %154 = math.exp %153 : vector<1x128xf32>
    %cst_39 = arith.constant 1.000000e+00 : f32
    %155 = vector.broadcast %cst_39 : f32 to vector<1x128xf32>
    %156 = arith.addf %155, %154 : vector<1x128xf32>
    %157 = arith.divf %155, %156 : vector<1x128xf32>
    %158 = arith.mulf %149, %129 : vector<1x128xf32>
    %159 = arith.mulf %143, %151 : vector<1x128xf32>
    %160 = arith.addf %158, %159 : vector<1x128xf32>
    %161 = math.tanh %160 : vector<1x128xf32>
    %162 = arith.mulf %157, %161 : vector<1x128xf32>
    %163 = arith.index_cast %c4_i32 : i32 to index
    %c0_40 = arith.constant 0 : index
    %164 = vector.load %arg8[%163, %c0_40] : memref<8x128xf32, #tpu.memory_space<vmem>>, vector<1x128xf32>
    tpu.vector_store %arg8[%163, %c0_40], %162 {strides = array<i32>} : memref<8x128xf32, #tpu.memory_space<vmem>>, vector<1x128xf32>,
    %c5_i32 = arith.constant 5 : i32
    %cst_41 = arith.constant dense<0.000000e+00> : vector<1x512xf32>
    %165 = tpu.matmul %162, %7, %cst_41 {dimension_numbers = #tpu.dot_dimension_numbers<[1], [0], [0], [1], [0, 0, 1, 1], [], []>} : vector<1x128xf32>, vector<128x512xf32>, vector<1x512xf32> -> vector<1x512xf32>
    %166 = arith.index_cast %c5_i32 : i32 to index
    %c0_42 = arith.constant 0 : index
    %167 = vector.load %arg7[%166, %c0_42] : memref<8x512xf32, #tpu.memory_space<vmem>>, vector<1x512xf32>
    %168 = arith.addf %165, %167 : vector<1x512xf32>
    %169 = vector.extract_strided_slice %168 {offsets = [0, 0], sizes = [1, 128], strides = [1, 1]} : vector<1x512xf32> to vector<1x128xf32>
    %170 = arith.negf %169 : vector<1x128xf32>
    %171 = math.exp %170 : vector<1x128xf32>
    %cst_43 = arith.constant 1.000000e+00 : f32
    %172 = vector.broadcast %cst_43 : f32 to vector<1x128xf32>
    %173 = arith.addf %172, %171 : vector<1x128xf32>
    %174 = arith.divf %172, %173 : vector<1x128xf32>
    %175 = vector.extract_strided_slice %168 {offsets = [0, 128], sizes = [1, 128], strides = [1, 1]} : vector<1x512xf32> to vector<1x128xf32>
    %176 = arith.negf %175 : vector<1x128xf32>
    %177 = math.exp %176 : vector<1x128xf32>
    %cst_44 = arith.constant 1.000000e+00 : f32
    %178 = vector.broadcast %cst_44 : f32 to vector<1x128xf32>
    %179 = arith.addf %178, %177 : vector<1x128xf32>
    %180 = arith.divf %178, %179 : vector<1x128xf32>
    %181 = vector.extract_strided_slice %168 {offsets = [0, 256], sizes = [1, 128], strides = [1, 1]} : vector<1x512xf32> to vector<1x128xf32>
    %182 = math.tanh %181 : vector<1x128xf32>
    %183 = vector.extract_strided_slice %168 {offsets = [0, 384], sizes = [1, 128], strides = [1, 1]} : vector<1x512xf32> to vector<1x128xf32>
    %184 = arith.negf %183 : vector<1x128xf32>
    %185 = math.exp %184 : vector<1x128xf32>
    %cst_45 = arith.constant 1.000000e+00 : f32
    %186 = vector.broadcast %cst_45 : f32 to vector<1x128xf32>
    %187 = arith.addf %186, %185 : vector<1x128xf32>
    %188 = arith.divf %186, %187 : vector<1x128xf32>
    %189 = arith.mulf %180, %160 : vector<1x128xf32>
    %190 = arith.mulf %174, %182 : vector<1x128xf32>
    %191 = arith.addf %189, %190 : vector<1x128xf32>
    %192 = math.tanh %191 : vector<1x128xf32>
    %193 = arith.mulf %188, %192 : vector<1x128xf32>
    %194 = arith.index_cast %c5_i32 : i32 to index
    %c0_46 = arith.constant 0 : index
    %195 = vector.load %arg8[%194, %c0_46] : memref<8x128xf32, #tpu.memory_space<vmem>>, vector<1x128xf32>
    tpu.vector_store %arg8[%194, %c0_46], %193 {strides = array<i32>} : memref<8x128xf32, #tpu.memory_space<vmem>>, vector<1x128xf32>,
    %c6_i32 = arith.constant 6 : i32
    %cst_47 = arith.constant dense<0.000000e+00> : vector<1x512xf32>
    %196 = tpu.matmul %193, %7, %cst_47 {dimension_numbers = #tpu.dot_dimension_numbers<[1], [0], [0], [1], [0, 0, 1, 1], [], []>} : vector<1x128xf32>, vector<128x512xf32>, vector<1x512xf32> -> vector<1x512xf32>
    %197 = arith.index_cast %c6_i32 : i32 to index
    %c0_48 = arith.constant 0 : index
    %198 = vector.load %arg7[%197, %c0_48] : memref<8x512xf32, #tpu.memory_space<vmem>>, vector<1x512xf32>
    %199 = arith.addf %196, %198 : vector<1x512xf32>
    %200 = vector.extract_strided_slice %199 {offsets = [0, 0], sizes = [1, 128], strides = [1, 1]} : vector<1x512xf32> to vector<1x128xf32>
    %201 = arith.negf %200 : vector<1x128xf32>
    %202 = math.exp %201 : vector<1x128xf32>
    %cst_49 = arith.constant 1.000000e+00 : f32
    %203 = vector.broadcast %cst_49 : f32 to vector<1x128xf32>
    %204 = arith.addf %203, %202 : vector<1x128xf32>
    %205 = arith.divf %203, %204 : vector<1x128xf32>
    %206 = vector.extract_strided_slice %199 {offsets = [0, 128], sizes = [1, 128], strides = [1, 1]} : vector<1x512xf32> to vector<1x128xf32>
    %207 = arith.negf %206 : vector<1x128xf32>
    %208 = math.exp %207 : vector<1x128xf32>
    %cst_50 = arith.constant 1.000000e+00 : f32
    %209 = vector.broadcast %cst_50 : f32 to vector<1x128xf32>
    %210 = arith.addf %209, %208 : vector<1x128xf32>
    %211 = arith.divf %209, %210 : vector<1x128xf32>
    %212 = vector.extract_strided_slice %199 {offsets = [0, 256], sizes = [1, 128], strides = [1, 1]} : vector<1x512xf32> to vector<1x128xf32>
    %213 = math.tanh %212 : vector<1x128xf32>
    %214 = vector.extract_strided_slice %199 {offsets = [0, 384], sizes = [1, 128], strides = [1, 1]} : vector<1x512xf32> to vector<1x128xf32>
    %215 = arith.negf %214 : vector<1x128xf32>
    %216 = math.exp %215 : vector<1x128xf32>
    %cst_51 = arith.constant 1.000000e+00 : f32
    %217 = vector.broadcast %cst_51 : f32 to vector<1x128xf32>
    %218 = arith.addf %217, %216 : vector<1x128xf32>
    %219 = arith.divf %217, %218 : vector<1x128xf32>
    %220 = arith.mulf %211, %191 : vector<1x128xf32>
    %221 = arith.mulf %205, %213 : vector<1x128xf32>
    %222 = arith.addf %220, %221 : vector<1x128xf32>
    %223 = math.tanh %222 : vector<1x128xf32>
    %224 = arith.mulf %219, %223 : vector<1x128xf32>
    %225 = arith.index_cast %c6_i32 : i32 to index
    %c0_52 = arith.constant 0 : index
    %226 = vector.load %arg8[%225, %c0_52] : memref<8x128xf32, #tpu.memory_space<vmem>>, vector<1x128xf32>
    tpu.vector_store %arg8[%225, %c0_52], %224 {strides = array<i32>} : memref<8x128xf32, #tpu.memory_space<vmem>>, vector<1x128xf32>,
    %c7_i32 = arith.constant 7 : i32
    %cst_53 = arith.constant dense<0.000000e+00> : vector<1x512xf32>
    %227 = tpu.matmul %224, %7, %cst_53 {dimension_numbers = #tpu.dot_dimension_numbers<[1], [0], [0], [1], [0, 0, 1, 1], [], []>} : vector<1x128xf32>, vector<128x512xf32>, vector<1x512xf32> -> vector<1x512xf32>
    %228 = arith.index_cast %c7_i32 : i32 to index
    %c0_54 = arith.constant 0 : index
    %229 = vector.load %arg7[%228, %c0_54] : memref<8x512xf32, #tpu.memory_space<vmem>>, vector<1x512xf32>
    %230 = arith.addf %227, %229 : vector<1x512xf32>
    %231 = vector.extract_strided_slice %230 {offsets = [0, 0], sizes = [1, 128], strides = [1, 1]} : vector<1x512xf32> to vector<1x128xf32>
    %232 = arith.negf %231 : vector<1x128xf32>
    %233 = math.exp %232 : vector<1x128xf32>
    %cst_55 = arith.constant 1.000000e+00 : f32
    %234 = vector.broadcast %cst_55 : f32 to vector<1x128xf32>
    %235 = arith.addf %234, %233 : vector<1x128xf32>
    %236 = arith.divf %234, %235 : vector<1x128xf32>
    %237 = vector.extract_strided_slice %230 {offsets = [0, 128], sizes = [1, 128], strides = [1, 1]} : vector<1x512xf32> to vector<1x128xf32>
    %238 = arith.negf %237 : vector<1x128xf32>
    %239 = math.exp %238 : vector<1x128xf32>
    %cst_56 = arith.constant 1.000000e+00 : f32
    %240 = vector.broadcast %cst_56 : f32 to vector<1x128xf32>
    %241 = arith.addf %240, %239 : vector<1x128xf32>
    %242 = arith.divf %240, %241 : vector<1x128xf32>
    %243 = vector.extract_strided_slice %230 {offsets = [0, 256], sizes = [1, 128], strides = [1, 1]} : vector<1x512xf32> to vector<1x128xf32>
    %244 = math.tanh %243 : vector<1x128xf32>
    %245 = vector.extract_strided_slice %230 {offsets = [0, 384], sizes = [1, 128], strides = [1, 1]} : vector<1x512xf32> to vector<1x128xf32>
    %246 = arith.negf %245 : vector<1x128xf32>
    %247 = math.exp %246 : vector<1x128xf32>
    %cst_57 = arith.constant 1.000000e+00 : f32
    %248 = vector.broadcast %cst_57 : f32 to vector<1x128xf32>
    %249 = arith.addf %248, %247 : vector<1x128xf32>
    %250 = arith.divf %248, %249 : vector<1x128xf32>
    %251 = arith.mulf %242, %222 : vector<1x128xf32>
    %252 = arith.mulf %236, %244 : vector<1x128xf32>
    %253 = arith.addf %251, %252 : vector<1x128xf32>
    %254 = math.tanh %253 : vector<1x128xf32>
    %255 = arith.mulf %250, %254 : vector<1x128xf32>
    %256 = arith.index_cast %c7_i32 : i32 to index
    %c0_58 = arith.constant 0 : index
    %257 = vector.load %arg8[%256, %c0_58] : memref<8x128xf32, #tpu.memory_space<vmem>>, vector<1x128xf32>
    tpu.vector_store %arg8[%256, %c0_58], %255 {strides = array<i32>} : memref<8x128xf32, #tpu.memory_space<vmem>>, vector<1x128xf32>,
    %c8_i32 = arith.constant 8 : i32
    %c0_59 = arith.constant 0 : index
    %c0_60 = arith.constant 0 : index
    %258 = vector.load %arg8[%c0_59, %c0_60] : memref<8x128xf32, #tpu.memory_space<vmem>>, vector<8x128xf32>
    %c0_61 = arith.constant 0 : index
    %c0_62 = arith.constant 0 : index
    %259 = vector.load %arg4[%c0_61, %c0_62] : memref<128x1xf32, #tpu.memory_space<vmem>>, vector<128x1xf32>
    %cst_63 = arith.constant dense<0.000000e+00> : vector<8x1xf32>
    %260 = tpu.matmul %258, %259, %cst_63 {dimension_numbers = #tpu.dot_dimension_numbers<[1], [0], [0], [1], [0, 0, 1, 1], [], []>} : vector<8x128xf32>, vector<128x1xf32>, vector<8x1xf32> -> vector<8x1xf32>
    %c0_64 = arith.constant 0 : index
    %c0_65 = arith.constant 0 : index
    %261 = vector.load %arg5[%c0_64, %c0_65] : memref<1x1xf32, #tpu.memory_space<vmem>>, vector<1x1xf32>
    %262 = vector.broadcast %261 : vector<1x1xf32> to vector<8x1xf32>
    %263 = arith.addf %260, %262 : vector<8x1xf32>
    %c0_66 = arith.constant 0 : index
    %c0_67 = arith.constant 0 : index
    %264 = vector.load %arg6[%c0_66, %c0_67] : memref<8x1xf32, #tpu.memory_space<vmem>>, vector<8x1xf32>
    tpu.vector_store %arg6[%c0_66, %c0_67], %263 {strides = array<i32>} : memref<8x1xf32, #tpu.memory_space<vmem>>, vector<8x1xf32>,
    return
  }
}

</mosaic_0001>

<llo_original>
// kernel: tpu_custom_call.1
$region0: #{tpu_custom_call.1}
  #allocation0 [shape = 'u32[]', space=smem, size = 0x4, offset = 0x4, fixed_abs, tag = 'smem constant byte address 0x4 - core index']
  #allocation1 [shape = 'u32[144,128]{1,0:T(1,128)}', space=vmem, size = 0x12000, scoped, tag = 'internal scratch']
  #allocation2 [shape = 'f32[8,512]{1,0:T(8,128)}', space=vmem, size = 0x4000, scoped, tag = 'scratch operand']
  #allocation3 [shape = 'f32[8,128]{1,0:T(8,128)}', space=vmem, size = 0x1000, scoped, tag = 'scratch operand']
  #allocation4 [shape = 'f32[1,1]{1,0:T(1,128)S(1)}', space=vmem, size = 0x200, scoped, tag = 'scoped memory for tpu_custom_call.1']
  %s0 = inlined_call_operand.vmem [shape: f32[8,16], index: 0, kind: input, shape index: {}]
  %s1 = inlined_call_operand.vmem [shape: f32[16,512], index: 1, kind: input, shape index: {}]
  %s2 = inlined_call_operand.hbm [shape: f32[128,512], index: 2, kind: input, shape index: {}]
  %s3 = inlined_call_operand.vmem [shape: f32[1,512], index: 3, kind: input, shape index: {}]
  %s4 = inlined_call_operand.vmem [shape: f32[128,1], index: 4, kind: input, shape index: {}]
  %s5 = inlined_call_operand.<no memory space> [shape: f32[1,1], index: 5, kind: input, shape index: {}]
  %s6 = inlined_call_operand.vmem [shape: f32[8,1], index: 6, kind: output, shape index: {}]
  %s7 = sld [smem:[#allocation0]]
  $region38: #{tpu_custom_call.1} parent=0
    _
  %s9 = ssub.s32 1, %s7
  %s10 = scalar_select 0, %s9, %s7
  %v11 = vstv %s5
  %12 = vst [vmem:[#allocation4] sm:$0x1] %v11
  $region1: #{tpu_custom_call.1} parent=0
    #allocation5 [shape = 'u8[262144]{0}', space=vmem, size = 0x40000, scoped, tag = 'input window, operand 2, single buffered']
    #allocation6 [shape = 's32[1]{0}', space=sflag, size = 0x4, scoped, tag = 'scoped memory for tpu_custom_call.1']
    %13 = vsyncpa [#allocation6], 0
    // Predicated region
    $region2: #{tpu_custom_call.1} parent=1 // pred_check
      _
    $region3: #{tpu_custom_call.1} parent=1 // pred_check_branch
      %15 = sbr.rel (0) target = $region5
    $region4: #{tpu_custom_call.1} parent=1 // pred_region
      _
    $region5: #{tpu_custom_call.1} parent=1 // pred_fallthru
      _
    // Predicated region
    $region6: #{tpu_custom_call.1} parent=1 // pred_check
      _
    $region7: #{tpu_custom_call.1} parent=1 // pred_check_branch
      %17 = sbr.rel (0) target = $region9
    $region8: #{tpu_custom_call.1} parent=1 // pred_region
      _
    $region9: #{tpu_custom_call.1} parent=1 // pred_fallthru
      _
    // Predicated region
    $region10: #{tpu_custom_call.1} parent=1 // pred_check
      _
    $region11: #{tpu_custom_call.1} parent=1 // pred_check_branch
      %19 = sbr.rel (0) target = $region13
    $region12: #{tpu_custom_call.1} parent=1 // pred_region
      %s21 = ssub.s32 8192, 8192
      %22 = vsyncadd [#allocation6], %s21
      %s23 = sshll.u32 [#allocation5], 4
      %s24 = int_to_ptr.vmem [resolvable:$true] %s23
      %29 = dma.hbm_to_vmem [thread:$0]  %s2, 8192, %s24, [#allocation6], 512, 512, 32
    $region13: #{tpu_custom_call.1} parent=1 // pred_fallthru
      _
    // Predicated region
    $region14: #{tpu_custom_call.1} parent=1 // pred_check
      _
    $region15: #{tpu_custom_call.1} parent=1 // pred_check_branch
      %31 = sbr.rel (0) target = $region17
    $region16: #{tpu_custom_call.1} parent=1 // pred_region
      _
    $region17: #{tpu_custom_call.1} parent=1 // pred_fallthru
      _
    // Predicated region
    $region18: #{tpu_custom_call.1} parent=1 // pred_check
      _
    $region19: #{tpu_custom_call.1} parent=1 // pred_check_branch
      %33 = sbr.rel (0) target = $region21
    $region20: #{tpu_custom_call.1} parent=1 // pred_region
      _
    $region21: #{tpu_custom_call.1} parent=1 // pred_fallthru
      _
    // Predicated region
    $region22: #{tpu_custom_call.1} parent=1 // pred_check
      _
    $region23: #{tpu_custom_call.1} parent=1 // pred_check_branch
      %35 = sbr.rel (0) target = $region25
    $region24: #{tpu_custom_call.1} parent=1 // pred_region
      _
    $region25: #{tpu_custom_call.1} parent=1 // pred_fallthru
      _
    // Predicated region
    $region26: #{tpu_custom_call.1} parent=1 // pred_check
      _
    $region27: #{tpu_custom_call.1} parent=1 // pred_check_branch
      %37 = sbr.rel (0) target = $region29
    $region28: #{tpu_custom_call.1} parent=1 // pred_region
      %38 = dma.done [#allocation6], 8192
    $region29: #{tpu_custom_call.1} parent=1 // pred_fallthru
      _
    %v39 = vld [vmem:[%s0] sm:$0xff]
    %v40 = vld [vmem:[%s1] sm:$0xff]
    %v41 = vld [vmem:[%s1 + $0x8] sm:$0xff]
    %v42 = vld [vmem:[%s1 + $0x10] sm:$0xff]
    %v43 = vld [vmem:[%s1 + $0x18] sm:$0xff]
    %v44 = vld [vmem:[%s1 + $0x20] sm:$0xff]
    %v45 = vld [vmem:[%s1 + $0x28] sm:$0xff]
    %v46 = vld [vmem:[%s1 + $0x30] sm:$0xff]
    %v47 = vld [vmem:[%s1 + $0x38] sm:$0xff]
    %v48 = vld [vmem:[%s3] sm:$0xf]
    %v50 = vlaneseq
    %v51 = vshrl.u32 %v50, 7
    %v52 = vsub.s32 0, %v51
    %v53 = vrot.slane %v48, %v52
    %v54 = vlaneseq
    %v55 = vshrl.u32 %v54, 7
    %v56 = vsub.s32 1, %v55
    %v57 = vrot.slane %v48, %v56
    %v58 = vlaneseq
    %v59 = vshrl.u32 %v58, 7
    %v60 = vsub.s32 2, %v59
    %v61 = vrot.slane %v48, %v60
    %v62 = vlaneseq
    %v63 = vshrl.u32 %v62, 7
    %v64 = vsub.s32 3, %v63
    %v65 = vrot.slane %v48, %v64
    %vm70 = vcmask 130048
    %v72 = vsel %vm70, %v39, 0
    %74 = vmatprep.subr.mxu0 %v41
    %75 = vmatpush1.msra.mxu0 %v40
    %76 = vmatprep.subr.mxu0 %v45
    %77 = vmatpush1.msra.mxu0 %v44
    %78 = vmatprep.subr.mxu0 0.0
    %79 = vmatpush1.msra.mxu0 0.0
    %80 = vmatprep.subr.mxu0 0.0
    %81 = vmatpush1.msra.mxu0 0.0
    %82 = vmatprep.subr.mxu0 0.0
    %83 = vmatpush1.msra.mxu0 0.0
    %84 = vmatprep.subr.mxu0 0.0
    %85 = vmatpush1.msra.mxu0 0.0
    %86 = vmatprep.subr.mxu0 0.0
    %87 = vmatpush1.msra.mxu0 0.0
    %88 = vmatprep.subr.mxu0 0.0
    %89 = vmatpush1.msra.mxu0 0.0
    %90 = vmatprep.subr.mxu0 0.0
    %91 = vmatpush1.msra.mxu0 0.0
    %92 = vmatprep.subr.mxu0 0.0
    %93 = vmatpush1.msra.mxu0 0.0
    %94 = vmatprep.subr.mxu0 0.0
    %95 = vmatpush1.msra.mxu0 0.0
    %96 = vmatprep.subr.mxu0 0.0
    %97 = vmatpush1.msra.mxu0 0.0
    %98 = vmatprep.subr.mxu0 0.0
    %99 = vmatpush1.msra.mxu0 0.0
    %100 = vmatprep.subr.mxu0 0.0
    %101 = vmatpush1.msra.mxu0 0.0
    %102 = vmatprep.subr.mxu0 0.0
    %103 = vmatpush1.msra.mxu0 0.0
    %104 = vmatprep.subr.mxu0 0.0
    %105 = vmatpush1.msra.mxu0 0.0
    %106 = vmatprep.subr.mxu0 0.0
    %107 = vmatpush1.msra.mxu0 0.0
    %108 = vmatprep.subr.mxu0 0.0
    %109 = vmatpush1.msra.mxu0 0.0
    %110 = vmatprep.subr.mxu0 0.0
    %111 = vmatpush1.msra.mxu0 0.0
    %112 = vmatprep.subr.mxu0 0.0
    %113 = vmatpush1.msra.mxu0 0.0
    %114 = vmatprep.subr.mxu0 0.0
    %115 = vmatpush1.msra.mxu0 0.0
    %116 = vmatprep.subr.mxu0 0.0
    %117 = vmatpush1.msra.mxu0 0.0
    %118 = vmatprep.subr.mxu0 0.0
    %119 = vmatpush1.msra.mxu0 0.0
    %120 = vmatprep.subr.mxu0 0.0
    %121 = vmatpush1.msra.mxu0 0.0
    %122 = vmatprep.subr.mxu0 0.0
    %123 = vmatpush1.msra.mxu0 0.0
    %124 = vmatprep.subr.mxu0 0.0
    %125 = vmatpush1.msra.mxu0 0.0
    %126 = vmatprep.subr.mxu0 0.0
    %127 = vmatpush1.msra.mxu0 0.0
    %128 = vmatprep.subr.mxu0 0.0
    %129 = vmatpush1.msra.mxu0 0.0
    %130 = vmatprep.subr.mxu0 0.0
    %131 = vmatpush1.msra.mxu0 0.0
    %132 = vmatprep.subr.mxu0 0.0
    %133 = vmatpush1.msra.mxu0 0.0
    %134 = vmatprep.subr.mxu0 0.0
    %135 = vmatpush1.msra.mxu0 0.0
    %136 = vmatprep.subr.mxu0 0.0
    %137 = vmatpush1.msra.mxu0 0.0
    %138 = vmatprep.mubr.f32.mxu0 0.0
    %139 = vmatmul.mubr.f32.gmra.mrb[0].mxu0 %v72
    %v140 = vpop.f32.mrb[0].mxu0
    %v141 = vadd.f32 %v53, %v140
    %v142 = vpop.f32.mrb[0].mxu0
    %v143 = vadd.f32 %v57, %v142
    %144 = vdwg.mxu0
    %145 = vmatprep.subr.mxu0 %v43
    %146 = vmatpush1.msra.mxu0 %v42
    %147 = vmatprep.subr.mxu0 %v47
    %148 = vmatpush1.msra.mxu0 %v46
    %149 = vmatprep.subr.mxu0 0.0
    %150 = vmatpush1.msra.mxu0 0.0
    %151 = vmatprep.subr.mxu0 0.0
    %152 = vmatpush1.msra.mxu0 0.0
    %153 = vmatprep.subr.mxu0 0.0
    %154 = vmatpush1.msra.mxu0 0.0
    %155 = vmatprep.subr.mxu0 0.0
    %156 = vmatpush1.msra.mxu0 0.0
    %157 = vmatprep.subr.mxu0 0.0
    %158 = vmatpush1.msra.mxu0 0.0
    %159 = vmatprep.subr.mxu0 0.0
    %160 = vmatpush1.msra.mxu0 0.0
    %161 = vmatprep.subr.mxu0 0.0
    %162 = vmatpush1.msra.mxu0 0.0
    %163 = vmatprep.subr.mxu0 0.0
    %164 = vmatpush1.msra.mxu0 0.0
    %165 = vmatprep.subr.mxu0 0.0
    %166 = vmatpush1.msra.mxu0 0.0
    %167 = vmatprep.subr.mxu0 0.0
    %168 = vmatpush1.msra.mxu0 0.0
    %169 = vmatprep.subr.mxu0 0.0
    %170 = vmatpush1.msra.mxu0 0.0
    %171 = vmatprep.subr.mxu0 0.0
    %172 = vmatpush1.msra.mxu0 0.0
    %173 = vmatprep.subr.mxu0 0.0
    %174 = vmatpush1.msra.mxu0 0.0
    %175 = vmatprep.subr.mxu0 0.0
    %176 = vmatpush1.msra.mxu0 0.0
    %177 = vmatprep.subr.mxu0 0.0
    %178 = vmatpush1.msra.mxu0 0.0
    %179 = vmatprep.subr.mxu0 0.0
    %180 = vmatpush1.msra.mxu0 0.0
    %181 = vmatprep.subr.mxu0 0.0
    %182 = vmatpush1.msra.mxu0 0.0
    %183 = vmatprep.subr.mxu0 0.0
    %184 = vmatpush1.msra.mxu0 0.0
    %185 = vmatprep.subr.mxu0 0.0
    %186 = vmatpush1.msra.mxu0 0.0
    %187 = vmatprep.subr.mxu0 0.0
    %188 = vmatpush1.msra.mxu0 0.0
    %189 = vmatprep.subr.mxu0 0.0
    %190 = vmatpush1.msra.mxu0 0.0
    %191 = vmatprep.subr.mxu0 0.0
    %192 = vmatpush1.msra.mxu0 0.0
    %193 = vmatprep.subr.mxu0 0.0
    %194 = vmatpush1.msra.mxu0 0.0
    %195 = vmatprep.subr.mxu0 0.0
    %196 = vmatpush1.msra.mxu0 0.0
    %197 = vmatprep.subr.mxu0 0.0
    %198 = vmatpush1.msra.mxu0 0.0
    %199 = vmatprep.subr.mxu0 0.0
    %200 = vmatpush1.msra.mxu0 0.0
    %201 = vmatprep.subr.mxu0 0.0
    %202 = vmatpush1.msra.mxu0 0.0
    %203 = vmatprep.subr.mxu0 0.0
    %204 = vmatpush1.msra.mxu0 0.0
    %205 = vmatprep.subr.mxu0 0.0
    %206 = vmatpush1.msra.mxu0 0.0
    %207 = vmatprep.subr.mxu0 0.0
    %208 = vmatpush1.msra.mxu0 0.0
    %209 = vmatprep.mubr.f32.mxu0 0.0
    %210 = vmatmul.mubr.f32.gmra.mrb[0].mxu0 %v72
    %v211 = vpop.f32.mrb[0].mxu0
    %v212 = vadd.f32 %v61, %v211
    %v213 = vpop.f32.mrb[0].mxu0
    %v214 = vadd.f32 %v65, %v213
    %215 = vdwg.mxu0
    %216 = vst [vmem:[#allocation2] sm:$0xff] %v141
    %217 = vst [vmem:[#allocation2 + $0x8] sm:$0xff] %v143
    %218 = vst [vmem:[#allocation2 + $0x10] sm:$0xff] %v212
    %219 = vst [vmem:[#allocation2 + $0x18] sm:$0xff] %v214
    %v220 = vld [vmem:[#allocation5] sm:$0xff]
    %v221 = vld [vmem:[#allocation5 + $0x8] sm:$0xff]
    %v222 = vld [vmem:[#allocation5 + $0x10] sm:$0xff]
    %v223 = vld [vmem:[#allocation5 + $0x18] sm:$0xff]
    %v224 = vld [vmem:[#allocation5 + $0x20] sm:$0xff]
    %v225 = vld [vmem:[#allocation5 + $0x28] sm:$0xff]
    %v226 = vld [vmem:[#allocation5 + $0x30] sm:$0xff]
    %v227 = vld [vmem:[#allocation5 + $0x38] sm:$0xff]
    %v228 = vld [vmem:[#allocation5 + $0x40] sm:$0xff]
    %v229 = vld [vmem:[#allocation5 + $0x48] sm:$0xff]
    %v230 = vld [vmem:[#allocation5 + $0x50] sm:$0xff]
    %v231 = vld [vmem:[#allocation5 + $0x58] sm:$0xff]
    %v232 = vld [vmem:[#allocation5 + $0x60] sm:$0xff]
    %v233 = vld [vmem:[#allocation5 + $0x68] sm:$0xff]
    %v234 = vld [vmem:[#allocation5 + $0x70] sm:$0xff]
    %v235 = vld [vmem:[#allocation5 + $0x78] sm:$0xff]
    %v236 = vld [vmem:[#allocation5 + $0x80] sm:$0xff]
    %v237 = vld [vmem:[#allocation5 + $0x88] sm:$0xff]
    %v238 = vld [vmem:[#allocation5 + $0x90] sm:$0xff]
    %v239 = vld [vmem:[#allocation5 + $0x98] sm:$0xff]
    %v240 = vld [vmem:[#allocation5 + $0xa0] sm:$0xff]
    %v241 = vld [vmem:[#allocation5 + $0xa8] sm:$0xff]
    %v242 = vld [vmem:[#allocation5 + $0xb0] sm:$0xff]
    %v243 = vld [vmem:[#allocation5 + $0xb8] sm:$0xff]
    %v244 = vld [vmem:[#allocation5 + $0xc0] sm:$0xff]
    %v245 = vld [vmem:[#allocation5 + $0xc8] sm:$0xff]
    %v246 = vld [vmem:[#allocation5 + $0xd0] sm:$0xff]
    %v247 = vld [vmem:[#allocation5 + $0xd8] sm:$0xff]
    %v248 = vld [vmem:[#allocation5 + $0xe0] sm:$0xff]
    %v249 = vld [vmem:[#allocation5 + $0xe8] sm:$0xff]
    %v250 = vld [vmem:[#allocation5 + $0xf0] sm:$0xff]
    %v251 = vld [vmem:[#allocation5 + $0xf8] sm:$0xff]
    %v252 = vld [vmem:[#allocation5 + $0x100] sm:$0xff]
    %v253 = vld [vmem:[#allocation5 + $0x108] sm:$0xff]
    %v254 = vld [vmem:[#allocation5 + $0x110] sm:$0xff]
    %v255 = vld [vmem:[#allocation5 + $0x118] sm:$0xff]
    %v256 = vld [vmem:[#allocation5 + $0x120] sm:$0xff]
    %v257 = vld [vmem:[#allocation5 + $0x128] sm:$0xff]
    %v258 = vld [vmem:[#allocation5 + $0x130] sm:$0xff]
    %v259 = vld [vmem:[#allocation5 + $0x138] sm:$0xff]
    %v260 = vld [vmem:[#allocation5 + $0x140] sm:$0xff]
    %v261 = vld [vmem:[#allocation5 + $0x148] sm:$0xff]
    %v262 = vld [vmem:[#allocation5 + $0x150] sm:$0xff]
    %v263 = vld [vmem:[#allocation5 + $0x158] sm:$0xff]
    %v264 = vld [vmem:[#allocation5 + $0x160] sm:$0xff]
    %v265 = vld [vmem:[#allocation5 + $0x168] sm:$0xff]
    %v266 = vld [vmem:[#allocation5 + $0x170] sm:$0xff]
    %v267 = vld [vmem:[#allocation5 + $0x178] sm:$0xff]
    %v268 = vld [vmem:[#allocation5 + $0x180] sm:$0xff]
    %v269 = vld [vmem:[#allocation5 + $0x188] sm:$0xff]
    %v270 = vld [vmem:[#allocation5 + $0x190] sm:$0xff]
    %v271 = vld [vmem:[#allocation5 + $0x198] sm:$0xff]
    %v272 = vld [vmem:[#allocation5 + $0x1a0] sm:$0xff]
    %v273 = vld [vmem:[#allocation5 + $0x1a8] sm:$0xff]
    %v274 = vld [vmem:[#allocation5 + $0x1b0] sm:$0xff]
    %v275 = vld [vmem:[#allocation5 + $0x1b8] sm:$0xff]
    %v276 = vld [vmem:[#allocation5 + $0x1c0] sm:$0xff]
    %v277 = vld [vmem:[#allocation5 + $0x1c8] sm:$0xff]
    %v278 = vld [vmem:[#allocation5 + $0x1d0] sm:$0xff]
    %v279 = vld [vmem:[#allocation5 + $0x1d8] sm:$0xff]
    %v280 = vld [vmem:[#allocation5 + $0x1e0] sm:$0xff]
    %v281 = vld [vmem:[#allocation5 + $0x1e8] sm:$0xff]
    %v282 = vld [vmem:[#allocation5 + $0x1f0] sm:$0xff]
    %v283 = vld [vmem:[#allocation5 + $0x1f8] sm:$0xff]
    %v284 = vld [vmem:[#allocation2] ss:$8 sm:$0xf]
    %v286 = vlaneseq
    %v287 = vshrl.u32 %v286, 7
    %v288 = vsub.s32 0, %v287
    %v289 = vrot.slane %v284, %v288
    %v290 = vlaneseq
    %v291 = vshrl.u32 %v290, 7
    %v292 = vsub.s32 1, %v291
    %v293 = vrot.slane %v284, %v292
    %v294 = vlaneseq
    %v295 = vshrl.u32 %v294, 7
    %v296 = vsub.s32 2, %v295
    %v297 = vrot.slane %v284, %v296
    %v298 = vlaneseq
    %v299 = vshrl.u32 %v298, 7
    %v300 = vsub.s32 3, %v299
    %v301 = vrot.slane %v284, %v300
    %306 = vmatprep.subr.mxu0 %v221
    %307 = vmatpush1.msra.mxu0 %v220
    %308 = vmatprep.subr.mxu0 %v225
    %309 = vmatpush1.msra.mxu0 %v224
    %310 = vmatprep.subr.mxu0 %v229
    %311 = vmatpush1.msra.mxu0 %v228
    %312 = vmatprep.subr.mxu0 %v233
    %313 = vmatpush1.msra.mxu0 %v232
    %314 = vmatprep.subr.mxu0 %v237
    %315 = vmatpush1.msra.mxu0 %v236
    %316 = vmatprep.subr.mxu0 %v241
    %317 = vmatpush1.msra.mxu0 %v240
    %318 = vmatprep.subr.mxu0 %v245
    %319 = vmatpush1.msra.mxu0 %v244
    %320 = vmatprep.subr.mxu0 %v249
    %321 = vmatpush1.msra.mxu0 %v248
    %322 = vmatprep.subr.mxu0 %v253
    %323 = vmatpush1.msra.mxu0 %v252
    %324 = vmatprep.subr.mxu0 %v257
    %325 = vmatpush1.msra.mxu0 %v256
    %326 = vmatprep.subr.mxu0 %v261
    %327 = vmatpush1.msra.mxu0 %v260
    %328 = vmatprep.subr.mxu0 %v265
    %329 = vmatpush1.msra.mxu0 %v264
    %330 = vmatprep.subr.mxu0 %v269
    %331 = vmatpush1.msra.mxu0 %v268
    %332 = vmatprep.subr.mxu0 %v273
    %333 = vmatpush1.msra.mxu0 %v272
    %334 = vmatprep.subr.mxu0 %v277
    %335 = vmatpush1.msra.mxu0 %v276
    %336 = vmatprep.subr.mxu0 %v281
    %337 = vmatpush1.msra.mxu0 %v280
    %338 = vmatprep.subr.mxu0 0.0
    %339 = vmatpush1.msra.mxu0 0.0
    %340 = vmatprep.subr.mxu0 0.0
    %341 = vmatpush1.msra.mxu0 0.0
    %342 = vmatprep.subr.mxu0 0.0
    %343 = vmatpush1.msra.mxu0 0.0
    %344 = vmatprep.subr.mxu0 0.0
    %345 = vmatpush1.msra.mxu0 0.0
    %346 = vmatprep.subr.mxu0 0.0
    %347 = vmatpush1.msra.mxu0 0.0
    %348 = vmatprep.subr.mxu0 0.0
    %349 = vmatpush1.msra.mxu0 0.0
    %350 = vmatprep.subr.mxu0 0.0
    %351 = vmatpush1.msra.mxu0 0.0
    %352 = vmatprep.subr.mxu0 0.0
    %353 = vmatpush1.msra.mxu0 0.0
    %354 = vmatprep.subr.mxu0 0.0
    %355 = vmatpush1.msra.mxu0 0.0
    %356 = vmatprep.subr.mxu0 0.0
    %357 = vmatpush1.msra.mxu0 0.0
    %358 = vmatprep.subr.mxu0 0.0
    %359 = vmatpush1.msra.mxu0 0.0
    %360 = vmatprep.subr.mxu0 0.0
    %361 = vmatpush1.msra.mxu0 0.0
    %362 = vmatprep.subr.mxu0 0.0
    %363 = vmatpush1.msra.mxu0 0.0
    %364 = vmatprep.subr.mxu0 0.0
    %365 = vmatpush1.msra.mxu0 0.0
    %366 = vmatprep.subr.mxu0 0.0
    %367 = vmatpush1.msra.mxu0 0.0
    %368 = vmatprep.subr.mxu0 0.0
    %369 = vmatpush1.msra.mxu0 0.0
    %370 = vmatprep.mubr.f32.mxu0 0.0
    %371 = vmatmul.mubr.f32.gmra.mrb[0].mxu0 0.0
    %v372 = vpop.f32.mrb[0].mxu0
    %v373 = vadd.f32 %v289, %v372
    %v374 = vpop.f32.mrb[0].mxu0
    %v375 = vadd.f32 %v293, %v374
    %376 = vdwg.mxu0
    %377 = vmatprep.subr.mxu0 %v223
    %378 = vmatpush1.msra.mxu0 %v222
    %379 = vmatprep.subr.mxu0 %v227
    %380 = vmatpush1.msra.mxu0 %v226
    %381 = vmatprep.subr.mxu0 %v231
    %382 = vmatpush1.msra.mxu0 %v230
    %383 = vmatprep.subr.mxu0 %v235
    %384 = vmatpush1.msra.mxu0 %v234
    %385 = vmatprep.subr.mxu0 %v239
    %386 = vmatpush1.msra.mxu0 %v238
    %387 = vmatprep.subr.mxu0 %v243
    %388 = vmatpush1.msra.mxu0 %v242
    %389 = vmatprep.subr.mxu0 %v247
    %390 = vmatpush1.msra.mxu0 %v246
    %391 = vmatprep.subr.mxu0 %v251
    %392 = vmatpush1.msra.mxu0 %v250
    %393 = vmatprep.subr.mxu0 %v255
    %394 = vmatpush1.msra.mxu0 %v254
    %395 = vmatprep.subr.mxu0 %v259
    %396 = vmatpush1.msra.mxu0 %v258
    %397 = vmatprep.subr.mxu0 %v263
    %398 = vmatpush1.msra.mxu0 %v262
    %399 = vmatprep.subr.mxu0 %v267
    %400 = vmatpush1.msra.mxu0 %v266
    %401 = vmatprep.subr.mxu0 %v271
    %402 = vmatpush1.msra.mxu0 %v270
    %403 = vmatprep.subr.mxu0 %v275
    %404 = vmatpush1.msra.mxu0 %v274
    %405 = vmatprep.subr.mxu0 %v279
    %406 = vmatpush1.msra.mxu0 %v278
    %407 = vmatprep.subr.mxu0 %v283
    %408 = vmatpush1.msra.mxu0 %v282
    %409 = vmatprep.subr.mxu0 0.0
    %410 = vmatpush1.msra.mxu0 0.0
    %411 = vmatprep.subr.mxu0 0.0
    %412 = vmatpush1.msra.mxu0 0.0
    %413 = vmatprep.subr.mxu0 0.0
    %414 = vmatpush1.msra.mxu0 0.0
    %415 = vmatprep.subr.mxu0 0.0
    %416 = vmatpush1.msra.mxu0 0.0
    %417 = vmatprep.subr.mxu0 0.0
    %418 = vmatpush1.msra.mxu0 0.0
    %419 = vmatprep.subr.mxu0 0.0
    %420 = vmatpush1.msra.mxu0 0.0
    %421 = vmatprep.subr.mxu0 0.0
    %422 = vmatpush1.msra.mxu0 0.0
    %423 = vmatprep.subr.mxu0 0.0
    %424 = vmatpush1.msra.mxu0 0.0
    %425 = vmatprep.subr.mxu0 0.0
    %426 = vmatpush1.msra.mxu0 0.0
    %427 = vmatprep.subr.mxu0 0.0
    %428 = vmatpush1.msra.mxu0 0.0
    %429 = vmatprep.subr.mxu0 0.0
    %430 = vmatpush1.msra.mxu0 0.0
    %431 = vmatprep.subr.mxu0 0.0
    %432 = vmatpush1.msra.mxu0 0.0
    %433 = vmatprep.subr.mxu0 0.0
    %434 = vmatpush1.msra.mxu0 0.0
    %435 = vmatprep.subr.mxu0 0.0
    %436 = vmatpush1.msra.mxu0 0.0
    %437 = vmatprep.subr.mxu0 0.0
    %438 = vmatpush1.msra.mxu0 0.0
    %439 = vmatprep.subr.mxu0 0.0
    %440 = vmatpush1.msra.mxu0 0.0
    %441 = vmatprep.mubr.f32.mxu0 0.0
    %442 = vmatmul.mubr.f32.gmra.mrb[0].mxu0 0.0
    %v443 = vpop.f32.mrb[0].mxu0
    %v444 = vadd.f32 %v297, %v443
    %v445 = vpop.f32.mrb[0].mxu0
    %v446 = vadd.f32 %v301, %v445
    %447 = vdwg.mxu0
    %v448 = vxor.u32 %v373, 2147483648
    %v449 = vmul.f32 %v448, 1.442695
    %v450 = vpow.pop %v449
    %v451 = vadd.f32 %v450, 1.0
    %v452 = vrcp.pop %v451
    %v453 = vmul.f32 1.0, %v452
    %v454 = vxor.u32 %v375, 2147483648
    %v455 = vmul.f32 %v454, 1.442695
    %v456 = vpow.pop %v455
    %v457 = vadd.f32 %v456, 1.0
    %v458 = vrcp.pop %v457
    %v459 = vmul.f32 1.0, %v458
    %v460 = vtanh.pop %v444
    %v461 = vxor.u32 %v446, 2147483648
    %v462 = vmul.f32 %v461, 1.442695
    %v463 = vpow.pop %v462
    %v464 = vadd.f32 %v463, 1.0
    %v465 = vrcp.pop %v464
    %v466 = vmul.f32 1.0, %v465
    %v467 = vmul.f32 %v459, 0.0
    %v468 = vmul.f32 %v453, %v460
    %v469 = vadd.f32 %v467, %v468
    %v470 = vtanh.pop %v469
    %v471 = vmul.f32 %v466, %v470
    %472 = vst [vmem:[#allocation3] sm:$0x1] %v471
    %s473 = scalar_lea.vmem [#allocation2], 1
    %v474 = vld [vmem:[%s473] ss:$8 sm:$0xf]
    %v476 = vlaneseq
    %v477 = vshrl.u32 %v476, 7
    %v478 = vsub.s32 0, %v477
    %v479 = vrot.slane %v474, %v478
    %v480 = vlaneseq
    %v481 = vshrl.u32 %v480, 7
    %v482 = vsub.s32 1, %v481
    %v483 = vrot.slane %v474, %v482
    %v484 = vlaneseq
    %v485 = vshrl.u32 %v484, 7
    %v486 = vsub.s32 2, %v485
    %v487 = vrot.slane %v474, %v486
    %v488 = vlaneseq
    %v489 = vshrl.u32 %v488, 7
    %v490 = vsub.s32 3, %v489
    %v491 = vrot.slane %v474, %v490
    %496 = vmatprep.subr.mxu0 %v221
    %497 = vmatpush1.msra.mxu0 %v220
    %498 = vmatprep.subr.mxu0 %v225
    %499 = vmatpush1.msra.mxu0 %v224
    %500 = vmatprep.subr.mxu0 %v229
    %501 = vmatpush1.msra.mxu0 %v228
    %502 = vmatprep.subr.mxu0 %v233
    %503 = vmatpush1.msra.mxu0 %v232
    %504 = vmatprep.subr.mxu0 %v237
    %505 = vmatpush1.msra.mxu0 %v236
    %506 = vmatprep.subr.mxu0 %v241
    %507 = vmatpush1.msra.mxu0 %v240
    %508 = vmatprep.subr.mxu0 %v245
    %509 = vmatpush1.msra.mxu0 %v244
    %510 = vmatprep.subr.mxu0 %v249
    %511 = vmatpush1.msra.mxu0 %v248
    %512 = vmatprep.subr.mxu0 %v253
    %513 = vmatpush1.msra.mxu0 %v252
    %514 = vmatprep.subr.mxu0 %v257
    %515 = vmatpush1.msra.mxu0 %v256
    %516 = vmatprep.subr.mxu0 %v261
    %517 = vmatpush1.msra.mxu0 %v260
    %518 = vmatprep.subr.mxu0 %v265
    %519 = vmatpush1.msra.mxu0 %v264
    %520 = vmatprep.subr.mxu0 %v269
    %521 = vmatpush1.msra.mxu0 %v268
    %522 = vmatprep.subr.mxu0 %v273
    %523 = vmatpush1.msra.mxu0 %v272
    %524 = vmatprep.subr.mxu0 %v277
    %525 = vmatpush1.msra.mxu0 %v276
    %526 = vmatprep.subr.mxu0 %v281
    %527 = vmatpush1.msra.mxu0 %v280
    %528 = vmatprep.subr.mxu0 0.0
    %529 = vmatpush1.msra.mxu0 0.0
    %530 = vmatprep.subr.mxu0 0.0
    %531 = vmatpush1.msra.mxu0 0.0
    %532 = vmatprep.subr.mxu0 0.0
    %533 = vmatpush1.msra.mxu0 0.0
    %534 = vmatprep.subr.mxu0 0.0
    %535 = vmatpush1.msra.mxu0 0.0
    %536 = vmatprep.subr.mxu0 0.0
    %537 = vmatpush1.msra.mxu0 0.0
    %538 = vmatprep.subr.mxu0 0.0
    %539 = vmatpush1.msra.mxu0 0.0
    %540 = vmatprep.subr.mxu0 0.0
    %541 = vmatpush1.msra.mxu0 0.0
    %542 = vmatprep.subr.mxu0 0.0
    %543 = vmatpush1.msra.mxu0 0.0
    %544 = vmatprep.subr.mxu0 0.0
    %545 = vmatpush1.msra.mxu0 0.0
    %546 = vmatprep.subr.mxu0 0.0
    %547 = vmatpush1.msra.mxu0 0.0
    %548 = vmatprep.subr.mxu0 0.0
    %549 = vmatpush1.msra.mxu0 0.0
    %550 = vmatprep.subr.mxu0 0.0
    %551 = vmatpush1.msra.mxu0 0.0
    %552 = vmatprep.subr.mxu0 0.0
    %553 = vmatpush1.msra.mxu0 0.0
    %554 = vmatprep.subr.mxu0 0.0
    %555 = vmatpush1.msra.mxu0 0.0
    %556 = vmatprep.subr.mxu0 0.0
    %557 = vmatpush1.msra.mxu0 0.0
    %558 = vmatprep.subr.mxu0 0.0
    %559 = vmatpush1.msra.mxu0 0.0
    %560 = vmatprep.mubr.f32.mxu0 0.0
    %561 = vmatmul.mubr.f32.gmra.mrb[0].mxu0 %v471
    %v562 = vpop.f32.mrb[0].mxu0
    %v563 = vadd.f32 %v479, %v562
    %v564 = vpop.f32.mrb[0].mxu0
    %v565 = vadd.f32 %v483, %v564
    %566 = vdwg.mxu0
    %567 = vmatprep.subr.mxu0 %v223
    %568 = vmatpush1.msra.mxu0 %v222
    %569 = vmatprep.subr.mxu0 %v227
    %570 = vmatpush1.msra.mxu0 %v226
    %571 = vmatprep.subr.mxu0 %v231
    %572 = vmatpush1.msra.mxu0 %v230
    %573 = vmatprep.subr.mxu0 %v235
    %574 = vmatpush1.msra.mxu0 %v234
    %575 = vmatprep.subr.mxu0 %v239
    %576 = vmatpush1.msra.mxu0 %v238
    %577 = vmatprep.subr.mxu0 %v243
    %578 = vmatpush1.msra.mxu0 %v242
    %579 = vmatprep.subr.mxu0 %v247
    %580 = vmatpush1.msra.mxu0 %v246
    %581 = vmatprep.subr.mxu0 %v251
    %582 = vmatpush1.msra.mxu0 %v250
    %583 = vmatprep.subr.mxu0 %v255
    %584 = vmatpush1.msra.mxu0 %v254
    %585 = vmatprep.subr.mxu0 %v259
    %586 = vmatpush1.msra.mxu0 %v258
    %587 = vmatprep.subr.mxu0 %v263
    %588 = vmatpush1.msra.mxu0 %v262
    %589 = vmatprep.subr.mxu0 %v267
    %590 = vmatpush1.msra.mxu0 %v266
    %591 = vmatprep.subr.mxu0 %v271
    %592 = vmatpush1.msra.mxu0 %v270
    %593 = vmatprep.subr.mxu0 %v275
    %594 = vmatpush1.msra.mxu0 %v274
    %595 = vmatprep.subr.mxu0 %v279
    %596 = vmatpush1.msra.mxu0 %v278
    %597 = vmatprep.subr.mxu0 %v283
    %598 = vmatpush1.msra.mxu0 %v282
    %599 = vmatprep.subr.mxu0 0.0
    %600 = vmatpush1.msra.mxu0 0.0
    %601 = vmatprep.subr.mxu0 0.0
    %602 = vmatpush1.msra.mxu0 0.0
    %603 = vmatprep.subr.mxu0 0.0
    %604 = vmatpush1.msra.mxu0 0.0
    %605 = vmatprep.subr.mxu0 0.0
    %606 = vmatpush1.msra.mxu0 0.0
    %607 = vmatprep.subr.mxu0 0.0
    %608 = vmatpush1.msra.mxu0 0.0
    %609 = vmatprep.subr.mxu0 0.0
    %610 = vmatpush1.msra.mxu0 0.0
    %611 = vmatprep.subr.mxu0 0.0
    %612 = vmatpush1.msra.mxu0 0.0
    %613 = vmatprep.subr.mxu0 0.0
    %614 = vmatpush1.msra.mxu0 0.0
    %615 = vmatprep.subr.mxu0 0.0
    %616 = vmatpush1.msra.mxu0 0.0
    %617 = vmatprep.subr.mxu0 0.0
    %618 = vmatpush1.msra.mxu0 0.0
    %619 = vmatprep.subr.mxu0 0.0
    %620 = vmatpush1.msra.mxu0 0.0
    %621 = vmatprep.subr.mxu0 0.0
    %622 = vmatpush1.msra.mxu0 0.0
    %623 = vmatprep.subr.mxu0 0.0
    %624 = vmatpush1.msra.mxu0 0.0
    %625 = vmatprep.subr.mxu0 0.0
    %626 = vmatpush1.msra.mxu0 0.0
    %627 = vmatprep.subr.mxu0 0.0
    %628 = vmatpush1.msra.mxu0 0.0
    %629 = vmatprep.subr.mxu0 0.0
    %630 = vmatpush1.msra.mxu0 0.0
    %631 = vmatprep.mubr.f32.mxu0 0.0
    %632 = vmatmul.mubr.f32.gmra.mrb[0].mxu0 %v471
    %v633 = vpop.f32.mrb[0].mxu0
    %v634 = vadd.f32 %v487, %v633
    %v635 = vpop.f32.mrb[0].mxu0
    %v636 = vadd.f32 %v491, %v635
    %637 = vdwg.mxu0
    %v638 = vxor.u32 %v563, 2147483648
    %v639 = vmul.f32 %v638, 1.442695
    %v640 = vpow.pop %v639
    %v641 = vadd.f32 %v640, 1.0
    %v642 = vrcp.pop %v641
    %v643 = vmul.f32 1.0, %v642
    %v644 = vxor.u32 %v565, 2147483648
    %v645 = vmul.f32 %v644, 1.442695
    %v646 = vpow.pop %v645
    %v647 = vadd.f32 %v646, 1.0
    %v648 = vrcp.pop %v647
    %v649 = vmul.f32 1.0, %v648
    %v650 = vtanh.pop %v634
    %v651 = vxor.u32 %v636, 2147483648
    %v652 = vmul.f32 %v651, 1.442695
    %v653 = vpow.pop %v652
    %v654 = vadd.f32 %v653, 1.0
    %v655 = vrcp.pop %v654
    %v656 = vmul.f32 1.0, %v655
    %v657 = vmul.f32 %v649, %v469
    %v658 = vmul.f32 %v643, %v650
    %v659 = vadd.f32 %v657, %v658
    %v660 = vtanh.pop %v659
    %v661 = vmul.f32 %v656, %v660
    %662 = vst [vmem:[#allocation3 + $0x1] sm:$0x1] %v661
    %s663 = scalar_lea.vmem [#allocation2], 2
    %v664 = vld [vmem:[%s663] ss:$8 sm:$0xf]
    %v666 = vlaneseq
    %v667 = vshrl.u32 %v666, 7
    %v668 = vsub.s32 0, %v667
    %v669 = vrot.slane %v664, %v668
    %v670 = vlaneseq
    %v671 = vshrl.u32 %v670, 7
    %v672 = vsub.s32 1, %v671
    %v673 = vrot.slane %v664, %v672
    %v674 = vlaneseq
    %v675 = vshrl.u32 %v674, 7
    %v676 = vsub.s32 2, %v675
    %v677 = vrot.slane %v664, %v676
    %v678 = vlaneseq
    %v679 = vshrl.u32 %v678, 7
    %v680 = vsub.s32 3, %v679
    %v681 = vrot.slane %v664, %v680
    %686 = vmatprep.subr.mxu0 %v221
    %687 = vmatpush1.msra.mxu0 %v220
    %688 = vmatprep.subr.mxu0 %v225
    %689 = vmatpush1.msra.mxu0 %v224
    %690 = vmatprep.subr.mxu0 %v229
    %691 = vmatpush1.msra.mxu0 %v228
    %692 = vmatprep.subr.mxu0 %v233
    %693 = vmatpush1.msra.mxu0 %v232
    %694 = vmatprep.subr.mxu0 %v237
    %695 = vmatpush1.msra.mxu0 %v236
    %696 = vmatprep.subr.mxu0 %v241
    %697 = vmatpush1.msra.mxu0 %v240
    %698 = vmatprep.subr.mxu0 %v245
    %699 = vmatpush1.msra.mxu0 %v244
    %700 = vmatprep.subr.mxu0 %v249
    %701 = vmatpush1.msra.mxu0 %v248
    %702 = vmatprep.subr.mxu0 %v253
    %703 = vmatpush1.msra.mxu0 %v252
    %704 = vmatprep.subr.mxu0 %v257
    %705 = vmatpush1.msra.mxu0 %v256
    %706 = vmatprep.subr.mxu0 %v261
    %707 = vmatpush1.msra.mxu0 %v260
    %708 = vmatprep.subr.mxu0 %v265
    %709 = vmatpush1.msra.mxu0 %v264
    %710 = vmatprep.subr.mxu0 %v269
    %711 = vmatpush1.msra.mxu0 %v268
    %712 = vmatprep.subr.mxu0 %v273
    %713 = vmatpush1.msra.mxu0 %v272
    %714 = vmatprep.subr.mxu0 %v277
    %715 = vmatpush1.msra.mxu0 %v276
    %716 = vmatprep.subr.mxu0 %v281
    %717 = vmatpush1.msra.mxu0 %v280
    %718 = vmatprep.subr.mxu0 0.0
    %719 = vmatpush1.msra.mxu0 0.0
    %720 = vmatprep.subr.mxu0 0.0
    %721 = vmatpush1.msra.mxu0 0.0
    %722 = vmatprep.subr.mxu0 0.0
    %723 = vmatpush1.msra.mxu0 0.0
    %724 = vmatprep.subr.mxu0 0.0
    %725 = vmatpush1.msra.mxu0 0.0
    %726 = vmatprep.subr.mxu0 0.0
    %727 = vmatpush1.msra.mxu0 0.0
    %728 = vmatprep.subr.mxu0 0.0
    %729 = vmatpush1.msra.mxu0 0.0
    %730 = vmatprep.subr.mxu0 0.0
    %731 = vmatpush1.msra.mxu0 0.0
    %732 = vmatprep.subr.mxu0 0.0
    %733 = vmatpush1.msra.mxu0 0.0
    %734 = vmatprep.subr.mxu0 0.0
    %735 = vmatpush1.msra.mxu0 0.0
    %736 = vmatprep.subr.mxu0 0.0
    %737 = vmatpush1.msra.mxu0 0.0
    %738 = vmatprep.subr.mxu0 0.0
    %739 = vmatpush1.msra.mxu0 0.0
    %740 = vmatprep.subr.mxu0 0.0
    %741 = vmatpush1.msra.mxu0 0.0
    %742 = vmatprep.subr.mxu0 0.0
    %743 = vmatpush1.msra.mxu0 0.0
    %744 = vmatprep.subr.mxu0 0.0
    %745 = vmatpush1.msra.mxu0 0.0
    %746 = vmatprep.subr.mxu0 0.0
    %747 = vmatpush1.msra.mxu0 0.0
    %748 = vmatprep.subr.mxu0 0.0
    %749 = vmatpush1.msra.mxu0 0.0
    %750 = vmatprep.mubr.f32.mxu0 0.0
    %751 = vmatmul.mubr.f32.gmra.mrb[0].mxu0 %v661
    %v752 = vpop.f32.mrb[0].mxu0
    %v753 = vadd.f32 %v669, %v752
    %v754 = vpop.f32.mrb[0].mxu0
    %v755 = vadd.f32 %v673, %v754
    %756 = vdwg.mxu0
    %757 = vmatprep.subr.mxu0 %v223
    %758 = vmatpush1.msra.mxu0 %v222
    %759 = vmatprep.subr.mxu0 %v227
    %760 = vmatpush1.msra.mxu0 %v226
    %761 = vmatprep.subr.mxu0 %v231
    %762 = vmatpush1.msra.mxu0 %v230
    %763 = vmatprep.subr.mxu0 %v235
    %764 = vmatpush1.msra.mxu0 %v234
    %765 = vmatprep.subr.mxu0 %v239
    %766 = vmatpush1.msra.mxu0 %v238
    %767 = vmatprep.subr.mxu0 %v243
    %768 = vmatpush1.msra.mxu0 %v242
    %769 = vmatprep.subr.mxu0 %v247
    %770 = vmatpush1.msra.mxu0 %v246
    %771 = vmatprep.subr.mxu0 %v251
    %772 = vmatpush1.msra.mxu0 %v250
    %773 = vmatprep.subr.mxu0 %v255
    %774 = vmatpush1.msra.mxu0 %v254
    %775 = vmatprep.subr.mxu0 %v259
    %776 = vmatpush1.msra.mxu0 %v258
    %777 = vmatprep.subr.mxu0 %v263
    %778 = vmatpush1.msra.mxu0 %v262
    %779 = vmatprep.subr.mxu0 %v267
    %780 = vmatpush1.msra.mxu0 %v266
    %781 = vmatprep.subr.mxu0 %v271
    %782 = vmatpush1.msra.mxu0 %v270
    %783 = vmatprep.subr.mxu0 %v275
    %784 = vmatpush1.msra.mxu0 %v274
    %785 = vmatprep.subr.mxu0 %v279
    %786 = vmatpush1.msra.mxu0 %v278
    %787 = vmatprep.subr.mxu0 %v283
    %788 = vmatpush1.msra.mxu0 %v282
    %789 = vmatprep.subr.mxu0 0.0
    %790 = vmatpush1.msra.mxu0 0.0
    %791 = vmatprep.subr.mxu0 0.0
    %792 = vmatpush1.msra.mxu0 0.0
    %793 = vmatprep.subr.mxu0 0.0
    %794 = vmatpush1.msra.mxu0 0.0
    %795 = vmatprep.subr.mxu0 0.0
    %796 = vmatpush1.msra.mxu0 0.0
    %797 = vmatprep.subr.mxu0 0.0
    %798 = vmatpush1.msra.mxu0 0.0
    %799 = vmatprep.subr.mxu0 0.0
    %800 = vmatpush1.msra.mxu0 0.0
    %801 = vmatprep.subr.mxu0 0.0
    %802 = vmatpush1.msra.mxu0 0.0
    %803 = vmatprep.subr.mxu0 0.0
    %804 = vmatpush1.msra.mxu0 0.0
    %805 = vmatprep.subr.mxu0 0.0
    %806 = vmatpush1.msra.mxu0 0.0
    %807 = vmatprep.subr.mxu0 0.0
    %808 = vmatpush1.msra.mxu0 0.0
    %809 = vmatprep.subr.mxu0 0.0
    %810 = vmatpush1.msra.mxu0 0.0
    %811 = vmatprep.subr.mxu0 0.0
    %812 = vmatpush1.msra.mxu0 0.0
    %813 = vmatprep.subr.mxu0 0.0
    %814 = vmatpush1.msra.mxu0 0.0
    %815 = vmatprep.subr.mxu0 0.0
    %816 = vmatpush1.msra.mxu0 0.0
    %817 = vmatprep.subr.mxu0 0.0
    %818 = vmatpush1.msra.mxu0 0.0
    %819 = vmatprep.subr.mxu0 0.0
    %820 = vmatpush1.msra.mxu0 0.0
    %821 = vmatprep.mubr.f32.mxu0 0.0
    %822 = vmatmul.mubr.f32.gmra.mrb[0].mxu0 %v661
    %v823 = vpop.f32.mrb[0].mxu0
    %v824 = vadd.f32 %v677, %v823
    %v825 = vpop.f32.mrb[0].mxu0
    %v826 = vadd.f32 %v681, %v825
    %827 = vdwg.mxu0
    %v828 = vxor.u32 %v753, 2147483648
    %v829 = vmul.f32 %v828, 1.442695
    %v830 = vpow.pop %v829
    %v831 = vadd.f32 %v830, 1.0
    %v832 = vrcp.pop %v831
    %v833 = vmul.f32 1.0, %v832
    %v834 = vxor.u32 %v755, 2147483648
    %v835 = vmul.f32 %v834, 1.442695
    %v836 = vpow.pop %v835
    %v837 = vadd.f32 %v836, 1.0
    %v838 = vrcp.pop %v837
    %v839 = vmul.f32 1.0, %v838
    %v840 = vtanh.pop %v824
    %v841 = vxor.u32 %v826, 2147483648
    %v842 = vmul.f32 %v841, 1.442695
    %v843 = vpow.pop %v842
    %v844 = vadd.f32 %v843, 1.0
    %v845 = vrcp.pop %v844
    %v846 = vmul.f32 1.0, %v845
    %v847 = vmul.f32 %v839, %v659
    %v848 = vmul.f32 %v833, %v840
    %v849 = vadd.f32 %v847, %v848
    %v850 = vtanh.pop %v849
    %v851 = vmul.f32 %v846, %v850
    %852 = vst [vmem:[#allocation3 + $0x2] sm:$0x1] %v851
    %s853 = scalar_lea.vmem [#allocation2], 3
    %v854 = vld [vmem:[%s853] ss:$8 sm:$0xf]
    %v856 = vlaneseq
    %v857 = vshrl.u32 %v856, 7
    %v858 = vsub.s32 0, %v857
    %v859 = vrot.slane %v854, %v858
    %v860 = vlaneseq
    %v861 = vshrl.u32 %v860, 7
    %v862 = vsub.s32 1, %v861
    %v863 = vrot.slane %v854, %v862
    %v864 = vlaneseq
    %v865 = vshrl.u32 %v864, 7
    %v866 = vsub.s32 2, %v865
    %v867 = vrot.slane %v854, %v866
    %v868 = vlaneseq
    %v869 = vshrl.u32 %v868, 7
    %v870 = vsub.s32 3, %v869
    %v871 = vrot.slane %v854, %v870
    %876 = vmatprep.subr.mxu0 %v221
    %877 = vmatpush1.msra.mxu0 %v220
    %878 = vmatprep.subr.mxu0 %v225
    %879 = vmatpush1.msra.mxu0 %v224
    %880 = vmatprep.subr.mxu0 %v229
    %881 = vmatpush1.msra.mxu0 %v228
    %882 = vmatprep.subr.mxu0 %v233
    %883 = vmatpush1.msra.mxu0 %v232
    %884 = vmatprep.subr.mxu0 %v237
    %885 = vmatpush1.msra.mxu0 %v236
    %886 = vmatprep.subr.mxu0 %v241
    %887 = vmatpush1.msra.mxu0 %v240
    %888 = vmatprep.subr.mxu0 %v245
    %889 = vmatpush1.msra.mxu0 %v244
    %890 = vmatprep.subr.mxu0 %v249
    %891 = vmatpush1.msra.mxu0 %v248
    %892 = vmatprep.subr.mxu0 %v253
    %893 = vmatpush1.msra.mxu0 %v252
    %894 = vmatprep.subr.mxu0 %v257
    %895 = vmatpush1.msra.mxu0 %v256
    %896 = vmatprep.subr.mxu0 %v261
    %897 = vmatpush1.msra.mxu0 %v260
    %898 = vmatprep.subr.mxu0 %v265
    %899 = vmatpush1.msra.mxu0 %v264
    %900 = vmatprep.subr.mxu0 %v269
    %901 = vmatpush1.msra.mxu0 %v268
    %902 = vmatprep.subr.mxu0 %v273
    %903 = vmatpush1.msra.mxu0 %v272
    %904 = vmatprep.subr.mxu0 %v277
    %905 = vmatpush1.msra.mxu0 %v276
    %906 = vmatprep.subr.mxu0 %v281
    %907 = vmatpush1.msra.mxu0 %v280
    %908 = vmatprep.subr.mxu0 0.0
    %909 = vmatpush1.msra.mxu0 0.0
    %910 = vmatprep.subr.mxu0 0.0
    %911 = vmatpush1.msra.mxu0 0.0
    %912 = vmatprep.subr.mxu0 0.0
    %913 = vmatpush1.msra.mxu0 0.0
    %914 = vmatprep.subr.mxu0 0.0
    %915 = vmatpush1.msra.mxu0 0.0
    %916 = vmatprep.subr.mxu0 0.0
    %917 = vmatpush1.msra.mxu0 0.0
    %918 = vmatprep.subr.mxu0 0.0
    %919 = vmatpush1.msra.mxu0 0.0
    %920 = vmatprep.subr.mxu0 0.0
    %921 = vmatpush1.msra.mxu0 0.0
    %922 = vmatprep.subr.mxu0 0.0
    %923 = vmatpush1.msra.mxu0 0.0
    %924 = vmatprep.subr.mxu0 0.0
    %925 = vmatpush1.msra.mxu0 0.0
    %926 = vmatprep.subr.mxu0 0.0
    %927 = vmatpush1.msra.mxu0 0.0
    %928 = vmatprep.subr.mxu0 0.0
    %929 = vmatpush1.msra.mxu0 0.0
    %930 = vmatprep.subr.mxu0 0.0
    %931 = vmatpush1.msra.mxu0 0.0
    %932 = vmatprep.subr.mxu0 0.0
    %933 = vmatpush1.msra.mxu0 0.0
    %934 = vmatprep.subr.mxu0 0.0
    %935 = vmatpush1.msra.mxu0 0.0
    %936 = vmatprep.subr.mxu0 0.0
    %937 = vmatpush1.msra.mxu0 0.0
    %938 = vmatprep.subr.mxu0 0.0
    %939 = vmatpush1.msra.mxu0 0.0
    %940 = vmatprep.mubr.f32.mxu0 0.0
    %941 = vmatmul.mubr.f32.gmra.mrb[0].mxu0 %v851
    %v942 = vpop.f32.mrb[0].mxu0
    %v943 = vadd.f32 %v859, %v942
    %v944 = vpop.f32.mrb[0].mxu0
    %v945 = vadd.f32 %v863, %v944
    %946 = vdwg.mxu0
    %947 = vmatprep.subr.mxu0 %v223
    %948 = vmatpush1.msra.mxu0 %v222
    %949 = vmatprep.subr.mxu0 %v227
    %950 = vmatpush1.msra.mxu0 %v226
    %951 = vmatprep.subr.mxu0 %v231
    %952 = vmatpush1.msra.mxu0 %v230
    %953 = vmatprep.subr.mxu0 %v235
    %954 = vmatpush1.msra.mxu0 %v234
    %955 = vmatprep.subr.mxu0 %v239
    %956 = vmatpush1.msra.mxu0 %v238
    %957 = vmatprep.subr.mxu0 %v243
    %958 = vmatpush1.msra.mxu0 %v242
    %959 = vmatprep.subr.mxu0 %v247
    %960 = vmatpush1.msra.mxu0 %v246
    %961 = vmatprep.subr.mxu0 %v251
    %962 = vmatpush1.msra.mxu0 %v250
    %963 = vmatprep.subr.mxu0 %v255
    %964 = vmatpush1.msra.mxu0 %v254
    %965 = vmatprep.subr.mxu0 %v259
    %966 = vmatpush1.msra.mxu0 %v258
    %967 = vmatprep.subr.mxu0 %v263
    %968 = vmatpush1.msra.mxu0 %v262
    %969 = vmatprep.subr.mxu0 %v267
    %970 = vmatpush1.msra.mxu0 %v266
    %971 = vmatprep.subr.mxu0 %v271
    %972 = vmatpush1.msra.mxu0 %v270
    %973 = vmatprep.subr.mxu0 %v275
    %974 = vmatpush1.msra.mxu0 %v274
    %975 = vmatprep.subr.mxu0 %v279
    %976 = vmatpush1.msra.mxu0 %v278
    %977 = vmatprep.subr.mxu0 %v283
    %978 = vmatpush1.msra.mxu0 %v282
    %979 = vmatprep.subr.mxu0 0.0
    %980 = vmatpush1.msra.mxu0 0.0
    %981 = vmatprep.subr.mxu0 0.0
    %982 = vmatpush1.msra.mxu0 0.0
    %983 = vmatprep.subr.mxu0 0.0
    %984 = vmatpush1.msra.mxu0 0.0
    %985 = vmatprep.subr.mxu0 0.0
    %986 = vmatpush1.msra.mxu0 0.0
    %987 = vmatprep.subr.mxu0 0.0
    %988 = vmatpush1.msra.mxu0 0.0
    %989 = vmatprep.subr.mxu0 0.0
    %990 = vmatpush1.msra.mxu0 0.0
    %991 = vmatprep.subr.mxu0 0.0
    %992 = vmatpush1.msra.mxu0 0.0
    %993 = vmatprep.subr.mxu0 0.0
    %994 = vmatpush1.msra.mxu0 0.0
    %995 = vmatprep.subr.mxu0 0.0
    %996 = vmatpush1.msra.mxu0 0.0
    %997 = vmatprep.subr.mxu0 0.0
    %998 = vmatpush1.msra.mxu0 0.0
    %999 = vmatprep.subr.mxu0 0.0
    %1000 = vmatpush1.msra.mxu0 0.0
    %1001 = vmatprep.subr.mxu0 0.0
    %1002 = vmatpush1.msra.mxu0 0.0
    %1003 = vmatprep.subr.mxu0 0.0
    %1004 = vmatpush1.msra.mxu0 0.0
    %1005 = vmatprep.subr.mxu0 0.0
    %1006 = vmatpush1.msra.mxu0 0.0
    %1007 = vmatprep.subr.mxu0 0.0
    %1008 = vmatpush1.msra.mxu0 0.0
    %1009 = vmatprep.subr.mxu0 0.0
    %1010 = vmatpush1.msra.mxu0 0.0
    %1011 = vmatprep.mubr.f32.mxu0 0.0
    %1012 = vmatmul.mubr.f32.gmra.mrb[0].mxu0 %v851
    %v1013 = vpop.f32.mrb[0].mxu0
    %v1014 = vadd.f32 %v867, %v1013
    %v1015 = vpop.f32.mrb[0].mxu0
    %v1016 = vadd.f32 %v871, %v1015
    %1017 = vdwg.mxu0
    %v1018 = vxor.u32 %v943, 2147483648
    %v1019 = vmul.f32 %v1018, 1.442695
    %v1020 = vpow.pop %v1019
    %v1021 = vadd.f32 %v1020, 1.0
    %v1022 = vrcp.pop %v1021
    %v1023 = vmul.f32 1.0, %v1022
    %v1024 = vxor.u32 %v945, 2147483648
    %v1025 = vmul.f32 %v1024, 1.442695
    %v1026 = vpow.pop %v1025
    %v1027 = vadd.f32 %v1026, 1.0
    %v1028 = vrcp.pop %v1027
    %v1029 = vmul.f32 1.0, %v1028
    %v1030 = vtanh.pop %v1014
    %v1031 = vxor.u32 %v1016, 2147483648
    %v1032 = vmul.f32 %v1031, 1.442695
    %v1033 = vpow.pop %v1032
    %v1034 = vadd.f32 %v1033, 1.0
    %v1035 = vrcp.pop %v1034
    %v1036 = vmul.f32 1.0, %v1035
    %v1037 = vmul.f32 %v1029, %v849
    %v1038 = vmul.f32 %v1023, %v1030
    %v1039 = vadd.f32 %v1037, %v1038
    %v1040 = vtanh.pop %v1039
    %v1041 = vmul.f32 %v1036, %v1040
    %1042 = vst [vmem:[#allocation3 + $0x3] sm:$0x1] %v1041
    %s1043 = scalar_lea.vmem [#allocation2], 4
    %v1044 = vld [vmem:[%s1043] ss:$8 sm:$0xf]
    %v1046 = vlaneseq
    %v1047 = vshrl.u32 %v1046, 7
    %v1048 = vsub.s32 0, %v1047
    %v1049 = vrot.slane %v1044, %v1048
    %v1050 = vlaneseq
    %v1051 = vshrl.u32 %v1050, 7
    %v1052 = vsub.s32 1, %v1051
    %v1053 = vrot.slane %v1044, %v1052
    %v1054 = vlaneseq
    %v1055 = vshrl.u32 %v1054, 7
    %v1056 = vsub.s32 2, %v1055
    %v1057 = vrot.slane %v1044, %v1056
    %v1058 = vlaneseq
    %v1059 = vshrl.u32 %v1058, 7
    %v1060 = vsub.s32 3, %v1059
    %v1061 = vrot.slane %v1044, %v1060
    %1066 = vmatprep.subr.mxu0 %v221
    %1067 = vmatpush1.msra.mxu0 %v220
    %1068 = vmatprep.subr.mxu0 %v225
    %1069 = vmatpush1.msra.mxu0 %v224
    %1070 = vmatprep.subr.mxu0 %v229
    %1071 = vmatpush1.msra.mxu0 %v228
    %1072 = vmatprep.subr.mxu0 %v233
    %1073 = vmatpush1.msra.mxu0 %v232
    %1074 = vmatprep.subr.mxu0 %v237
    %1075 = vmatpush1.msra.mxu0 %v236
    %1076 = vmatprep.subr.mxu0 %v241
    %1077 = vmatpush1.msra.mxu0 %v240
    %1078 = vmatprep.subr.mxu0 %v245
    %1079 = vmatpush1.msra.mxu0 %v244
    %1080 = vmatprep.subr.mxu0 %v249
    %1081 = vmatpush1.msra.mxu0 %v248
    %1082 = vmatprep.subr.mxu0 %v253
    %1083 = vmatpush1.msra.mxu0 %v252
    %1084 = vmatprep.subr.mxu0 %v257
    %1085 = vmatpush1.msra.mxu0 %v256
    %1086 = vmatprep.subr.mxu0 %v261
    %1087 = vmatpush1.msra.mxu0 %v260
    %1088 = vmatprep.subr.mxu0 %v265
    %1089 = vmatpush1.msra.mxu0 %v264
    %1090 = vmatprep.subr.mxu0 %v269
    %1091 = vmatpush1.msra.mxu0 %v268
    %1092 = vmatprep.subr.mxu0 %v273
    %1093 = vmatpush1.msra.mxu0 %v272
    %1094 = vmatprep.subr.mxu0 %v277
    %1095 = vmatpush1.msra.mxu0 %v276
    %1096 = vmatprep.subr.mxu0 %v281
    %1097 = vmatpush1.msra.mxu0 %v280
    %1098 = vmatprep.subr.mxu0 0.0
    %1099 = vmatpush1.msra.mxu0 0.0
    %1100 = vmatprep.subr.mxu0 0.0
    %1101 = vmatpush1.msra.mxu0 0.0
    %1102 = vmatprep.subr.mxu0 0.0
    %1103 = vmatpush1.msra.mxu0 0.0
    %1104 = vmatprep.subr.mxu0 0.0
    %1105 = vmatpush1.msra.mxu0 0.0
    %1106 = vmatprep.subr.mxu0 0.0
    %1107 = vmatpush1.msra.mxu0 0.0
    %1108 = vmatprep.subr.mxu0 0.0
    %1109 = vmatpush1.msra.mxu0 0.0
    %1110 = vmatprep.subr.mxu0 0.0
    %1111 = vmatpush1.msra.mxu0 0.0
    %1112 = vmatprep.subr.mxu0 0.0
    %1113 = vmatpush1.msra.mxu0 0.0
    %1114 = vmatprep.subr.mxu0 0.0
    %1115 = vmatpush1.msra.mxu0 0.0
    %1116 = vmatprep.subr.mxu0 0.0
    %1117 = vmatpush1.msra.mxu0 0.0
    %1118 = vmatprep.subr.mxu0 0.0
    %1119 = vmatpush1.msra.mxu0 0.0
    %1120 = vmatprep.subr.mxu0 0.0
    %1121 = vmatpush1.msra.mxu0 0.0
    %1122 = vmatprep.subr.mxu0 0.0
    %1123 = vmatpush1.msra.mxu0 0.0
    %1124 = vmatprep.subr.mxu0 0.0
    %1125 = vmatpush1.msra.mxu0 0.0
    %1126 = vmatprep.subr.mxu0 0.0
    %1127 = vmatpush1.msra.mxu0 0.0
    %1128 = vmatprep.subr.mxu0 0.0
    %1129 = vmatpush1.msra.mxu0 0.0
    %1130 = vmatprep.mubr.f32.mxu0 0.0
    %1131 = vmatmul.mubr.f32.gmra.mrb[0].mxu0 %v1041
    %v1132 = vpop.f32.mrb[0].mxu0
    %v1133 = vadd.f32 %v1049, %v1132
    %v1134 = vpop.f32.mrb[0].mxu0
    %v1135 = vadd.f32 %v1053, %v1134
    %1136 = vdwg.mxu0
    %1137 = vmatprep.subr.mxu0 %v223
    %1138 = vmatpush1.msra.mxu0 %v222
    %1139 = vmatprep.subr.mxu0 %v227
    %1140 = vmatpush1.msra.mxu0 %v226
    %1141 = vmatprep.subr.mxu0 %v231
    %1142 = vmatpush1.msra.mxu0 %v230
    %1143 = vmatprep.subr.mxu0 %v235
    %1144 = vmatpush1.msra.mxu0 %v234
    %1145 = vmatprep.subr.mxu0 %v239
    %1146 = vmatpush1.msra.mxu0 %v238
    %1147 = vmatprep.subr.mxu0 %v243
    %1148 = vmatpush1.msra.mxu0 %v242
    %1149 = vmatprep.subr.mxu0 %v247
    %1150 = vmatpush1.msra.mxu0 %v246
    %1151 = vmatprep.subr.mxu0 %v251
    %1152 = vmatpush1.msra.mxu0 %v250
    %1153 = vmatprep.subr.mxu0 %v255
    %1154 = vmatpush1.msra.mxu0 %v254
    %1155 = vmatprep.subr.mxu0 %v259
    %1156 = vmatpush1.msra.mxu0 %v258
    %1157 = vmatprep.subr.mxu0 %v263
    %1158 = vmatpush1.msra.mxu0 %v262
    %1159 = vmatprep.subr.mxu0 %v267
    %1160 = vmatpush1.msra.mxu0 %v266
    %1161 = vmatprep.subr.mxu0 %v271
    %1162 = vmatpush1.msra.mxu0 %v270
    %1163 = vmatprep.subr.mxu0 %v275
    %1164 = vmatpush1.msra.mxu0 %v274
    %1165 = vmatprep.subr.mxu0 %v279
    %1166 = vmatpush1.msra.mxu0 %v278
    %1167 = vmatprep.subr.mxu0 %v283
    %1168 = vmatpush1.msra.mxu0 %v282
    %1169 = vmatprep.subr.mxu0 0.0
    %1170 = vmatpush1.msra.mxu0 0.0
    %1171 = vmatprep.subr.mxu0 0.0
    %1172 = vmatpush1.msra.mxu0 0.0
    %1173 = vmatprep.subr.mxu0 0.0
    %1174 = vmatpush1.msra.mxu0 0.0
    %1175 = vmatprep.subr.mxu0 0.0
    %1176 = vmatpush1.msra.mxu0 0.0
    %1177 = vmatprep.subr.mxu0 0.0
    %1178 = vmatpush1.msra.mxu0 0.0
    %1179 = vmatprep.subr.mxu0 0.0
    %1180 = vmatpush1.msra.mxu0 0.0
    %1181 = vmatprep.subr.mxu0 0.0
    %1182 = vmatpush1.msra.mxu0 0.0
    %1183 = vmatprep.subr.mxu0 0.0
    %1184 = vmatpush1.msra.mxu0 0.0
    %1185 = vmatprep.subr.mxu0 0.0
    %1186 = vmatpush1.msra.mxu0 0.0
    %1187 = vmatprep.subr.mxu0 0.0
    %1188 = vmatpush1.msra.mxu0 0.0
    %1189 = vmatprep.subr.mxu0 0.0
    %1190 = vmatpush1.msra.mxu0 0.0
    %1191 = vmatprep.subr.mxu0 0.0
    %1192 = vmatpush1.msra.mxu0 0.0
    %1193 = vmatprep.subr.mxu0 0.0
    %1194 = vmatpush1.msra.mxu0 0.0
    %1195 = vmatprep.subr.mxu0 0.0
    %1196 = vmatpush1.msra.mxu0 0.0
    %1197 = vmatprep.subr.mxu0 0.0
    %1198 = vmatpush1.msra.mxu0 0.0
    %1199 = vmatprep.subr.mxu0 0.0
    %1200 = vmatpush1.msra.mxu0 0.0
    %1201 = vmatprep.mubr.f32.mxu0 0.0
    %1202 = vmatmul.mubr.f32.gmra.mrb[0].mxu0 %v1041
    %v1203 = vpop.f32.mrb[0].mxu0
    %v1204 = vadd.f32 %v1057, %v1203
    %v1205 = vpop.f32.mrb[0].mxu0
    %v1206 = vadd.f32 %v1061, %v1205
    %1207 = vdwg.mxu0
    %v1208 = vxor.u32 %v1133, 2147483648
    %v1209 = vmul.f32 %v1208, 1.442695
    %v1210 = vpow.pop %v1209
    %v1211 = vadd.f32 %v1210, 1.0
    %v1212 = vrcp.pop %v1211
    %v1213 = vmul.f32 1.0, %v1212
    %v1214 = vxor.u32 %v1135, 2147483648
    %v1215 = vmul.f32 %v1214, 1.442695
    %v1216 = vpow.pop %v1215
    %v1217 = vadd.f32 %v1216, 1.0
    %v1218 = vrcp.pop %v1217
    %v1219 = vmul.f32 1.0, %v1218
    %v1220 = vtanh.pop %v1204
    %v1221 = vxor.u32 %v1206, 2147483648
    %v1222 = vmul.f32 %v1221, 1.442695
    %v1223 = vpow.pop %v1222
    %v1224 = vadd.f32 %v1223, 1.0
    %v1225 = vrcp.pop %v1224
    %v1226 = vmul.f32 1.0, %v1225
    %v1227 = vmul.f32 %v1219, %v1039
    %v1228 = vmul.f32 %v1213, %v1220
    %v1229 = vadd.f32 %v1227, %v1228
    %v1230 = vtanh.pop %v1229
    %v1231 = vmul.f32 %v1226, %v1230
    %1232 = vst [vmem:[#allocation3 + $0x4] sm:$0x1] %v1231
    %s1233 = scalar_lea.vmem [#allocation2], 5
    %v1234 = vld [vmem:[%s1233] ss:$8 sm:$0xf]
    %v1236 = vlaneseq
    %v1237 = vshrl.u32 %v1236, 7
    %v1238 = vsub.s32 0, %v1237
    %v1239 = vrot.slane %v1234, %v1238
    %v1240 = vlaneseq
    %v1241 = vshrl.u32 %v1240, 7
    %v1242 = vsub.s32 1, %v1241
    %v1243 = vrot.slane %v1234, %v1242
    %v1244 = vlaneseq
    %v1245 = vshrl.u32 %v1244, 7
    %v1246 = vsub.s32 2, %v1245
    %v1247 = vrot.slane %v1234, %v1246
    %v1248 = vlaneseq
    %v1249 = vshrl.u32 %v1248, 7
    %v1250 = vsub.s32 3, %v1249
    %v1251 = vrot.slane %v1234, %v1250
    %1256 = vmatprep.subr.mxu0 %v221
    %1257 = vmatpush1.msra.mxu0 %v220
    %1258 = vmatprep.subr.mxu0 %v225
    %1259 = vmatpush1.msra.mxu0 %v224
    %1260 = vmatprep.subr.mxu0 %v229
    %1261 = vmatpush1.msra.mxu0 %v228
    %1262 = vmatprep.subr.mxu0 %v233
    %1263 = vmatpush1.msra.mxu0 %v232
    %1264 = vmatprep.subr.mxu0 %v237
    %1265 = vmatpush1.msra.mxu0 %v236
    %1266 = vmatprep.subr.mxu0 %v241
    %1267 = vmatpush1.msra.mxu0 %v240
    %1268 = vmatprep.subr.mxu0 %v245
    %1269 = vmatpush1.msra.mxu0 %v244
    %1270 = vmatprep.subr.mxu0 %v249
    %1271 = vmatpush1.msra.mxu0 %v248
    %1272 = vmatprep.subr.mxu0 %v253
    %1273 = vmatpush1.msra.mxu0 %v252
    %1274 = vmatprep.subr.mxu0 %v257
    %1275 = vmatpush1.msra.mxu0 %v256
    %1276 = vmatprep.subr.mxu0 %v261
    %1277 = vmatpush1.msra.mxu0 %v260
    %1278 = vmatprep.subr.mxu0 %v265
    %1279 = vmatpush1.msra.mxu0 %v264
    %1280 = vmatprep.subr.mxu0 %v269
    %1281 = vmatpush1.msra.mxu0 %v268
    %1282 = vmatprep.subr.mxu0 %v273
    %1283 = vmatpush1.msra.mxu0 %v272
    %1284 = vmatprep.subr.mxu0 %v277
    %1285 = vmatpush1.msra.mxu0 %v276
    %1286 = vmatprep.subr.mxu0 %v281
    %1287 = vmatpush1.msra.mxu0 %v280
    %1288 = vmatprep.subr.mxu0 0.0
    %1289 = vmatpush1.msra.mxu0 0.0
    %1290 = vmatprep.subr.mxu0 0.0
    %1291 = vmatpush1.msra.mxu0 0.0
    %1292 = vmatprep.subr.mxu0 0.0
    %1293 = vmatpush1.msra.mxu0 0.0
    %1294 = vmatprep.subr.mxu0 0.0
    %1295 = vmatpush1.msra.mxu0 0.0
    %1296 = vmatprep.subr.mxu0 0.0
    %1297 = vmatpush1.msra.mxu0 0.0
    %1298 = vmatprep.subr.mxu0 0.0
    %1299 = vmatpush1.msra.mxu0 0.0
    %1300 = vmatprep.subr.mxu0 0.0
    %1301 = vmatpush1.msra.mxu0 0.0
    %1302 = vmatprep.subr.mxu0 0.0
    %1303 = vmatpush1.msra.mxu0 0.0
    %1304 = vmatprep.subr.mxu0 0.0
    %1305 = vmatpush1.msra.mxu0 0.0
    %1306 = vmatprep.subr.mxu0 0.0
    %1307 = vmatpush1.msra.mxu0 0.0
    %1308 = vmatprep.subr.mxu0 0.0
    %1309 = vmatpush1.msra.mxu0 0.0
    %1310 = vmatprep.subr.mxu0 0.0
    %1311 = vmatpush1.msra.mxu0 0.0
    %1312 = vmatprep.subr.mxu0 0.0
    %1313 = vmatpush1.msra.mxu0 0.0
    %1314 = vmatprep.subr.mxu0 0.0
    %1315 = vmatpush1.msra.mxu0 0.0
    %1316 = vmatprep.subr.mxu0 0.0
    %1317 = vmatpush1.msra.mxu0 0.0
    %1318 = vmatprep.subr.mxu0 0.0
    %1319 = vmatpush1.msra.mxu0 0.0
    %1320 = vmatprep.mubr.f32.mxu0 0.0
    %1321 = vmatmul.mubr.f32.gmra.mrb[0].mxu0 %v1231
    %v1322 = vpop.f32.mrb[0].mxu0
    %v1323 = vadd.f32 %v1239, %v1322
    %v1324 = vpop.f32.mrb[0].mxu0
    %v1325 = vadd.f32 %v1243, %v1324
    %1326 = vdwg.mxu0
    %1327 = vmatprep.subr.mxu0 %v223
    %1328 = vmatpush1.msra.mxu0 %v222
    %1329 = vmatprep.subr.mxu0 %v227
    %1330 = vmatpush1.msra.mxu0 %v226
    %1331 = vmatprep.subr.mxu0 %v231
    %1332 = vmatpush1.msra.mxu0 %v230
    %1333 = vmatprep.subr.mxu0 %v235
    %1334 = vmatpush1.msra.mxu0 %v234
    %1335 = vmatprep.subr.mxu0 %v239
    %1336 = vmatpush1.msra.mxu0 %v238
    %1337 = vmatprep.subr.mxu0 %v243
    %1338 = vmatpush1.msra.mxu0 %v242
    %1339 = vmatprep.subr.mxu0 %v247
    %1340 = vmatpush1.msra.mxu0 %v246
    %1341 = vmatprep.subr.mxu0 %v251
    %1342 = vmatpush1.msra.mxu0 %v250
    %1343 = vmatprep.subr.mxu0 %v255
    %1344 = vmatpush1.msra.mxu0 %v254
    %1345 = vmatprep.subr.mxu0 %v259
    %1346 = vmatpush1.msra.mxu0 %v258
    %1347 = vmatprep.subr.mxu0 %v263
    %1348 = vmatpush1.msra.mxu0 %v262
    %1349 = vmatprep.subr.mxu0 %v267
    %1350 = vmatpush1.msra.mxu0 %v266
    %1351 = vmatprep.subr.mxu0 %v271
    %1352 = vmatpush1.msra.mxu0 %v270
    %1353 = vmatprep.subr.mxu0 %v275
    %1354 = vmatpush1.msra.mxu0 %v274
    %1355 = vmatprep.subr.mxu0 %v279
    %1356 = vmatpush1.msra.mxu0 %v278
    %1357 = vmatprep.subr.mxu0 %v283
    %1358 = vmatpush1.msra.mxu0 %v282
    %1359 = vmatprep.subr.mxu0 0.0
    %1360 = vmatpush1.msra.mxu0 0.0
    %1361 = vmatprep.subr.mxu0 0.0
    %1362 = vmatpush1.msra.mxu0 0.0
    %1363 = vmatprep.subr.mxu0 0.0
    %1364 = vmatpush1.msra.mxu0 0.0
    %1365 = vmatprep.subr.mxu0 0.0
    %1366 = vmatpush1.msra.mxu0 0.0
    %1367 = vmatprep.subr.mxu0 0.0
    %1368 = vmatpush1.msra.mxu0 0.0
    %1369 = vmatprep.subr.mxu0 0.0
    %1370 = vmatpush1.msra.mxu0 0.0
    %1371 = vmatprep.subr.mxu0 0.0
    %1372 = vmatpush1.msra.mxu0 0.0
    %1373 = vmatprep.subr.mxu0 0.0
    %1374 = vmatpush1.msra.mxu0 0.0
    %1375 = vmatprep.subr.mxu0 0.0
    %1376 = vmatpush1.msra.mxu0 0.0
    %1377 = vmatprep.subr.mxu0 0.0
    %1378 = vmatpush1.msra.mxu0 0.0
    %1379 = vmatprep.subr.mxu0 0.0
    %1380 = vmatpush1.msra.mxu0 0.0
    %1381 = vmatprep.subr.mxu0 0.0
    %1382 = vmatpush1.msra.mxu0 0.0
    %1383 = vmatprep.subr.mxu0 0.0
    %1384 = vmatpush1.msra.mxu0 0.0
    %1385 = vmatprep.subr.mxu0 0.0
    %1386 = vmatpush1.msra.mxu0 0.0
    %1387 = vmatprep.subr.mxu0 0.0
    %1388 = vmatpush1.msra.mxu0 0.0
    %1389 = vmatprep.subr.mxu0 0.0
    %1390 = vmatpush1.msra.mxu0 0.0
    %1391 = vmatprep.mubr.f32.mxu0 0.0
    %1392 = vmatmul.mubr.f32.gmra.mrb[0].mxu0 %v1231
    %v1393 = vpop.f32.mrb[0].mxu0
    %v1394 = vadd.f32 %v1247, %v1393
    %v1395 = vpop.f32.mrb[0].mxu0
    %v1396 = vadd.f32 %v1251, %v1395
    %1397 = vdwg.mxu0
    %v1398 = vxor.u32 %v1323, 2147483648
    %v1399 = vmul.f32 %v1398, 1.442695
    %v1400 = vpow.pop %v1399
    %v1401 = vadd.f32 %v1400, 1.0
    %v1402 = vrcp.pop %v1401
    %v1403 = vmul.f32 1.0, %v1402
    %v1404 = vxor.u32 %v1325, 2147483648
    %v1405 = vmul.f32 %v1404, 1.442695
    %v1406 = vpow.pop %v1405
    %v1407 = vadd.f32 %v1406, 1.0
    %v1408 = vrcp.pop %v1407
    %v1409 = vmul.f32 1.0, %v1408
    %v1410 = vtanh.pop %v1394
    %v1411 = vxor.u32 %v1396, 2147483648
    %v1412 = vmul.f32 %v1411, 1.442695
    %v1413 = vpow.pop %v1412
    %v1414 = vadd.f32 %v1413, 1.0
    %v1415 = vrcp.pop %v1414
    %v1416 = vmul.f32 1.0, %v1415
    %v1417 = vmul.f32 %v1409, %v1229
    %v1418 = vmul.f32 %v1403, %v1410
    %v1419 = vadd.f32 %v1417, %v1418
    %v1420 = vtanh.pop %v1419
    %v1421 = vmul.f32 %v1416, %v1420
    %1422 = vst [vmem:[#allocation3 + $0x5] sm:$0x1] %v1421
    %s1423 = scalar_lea.vmem [#allocation2], 6
    %v1424 = vld [vmem:[%s1423] ss:$8 sm:$0xf]
    %v1426 = vlaneseq
    %v1427 = vshrl.u32 %v1426, 7
    %v1428 = vsub.s32 0, %v1427
    %v1429 = vrot.slane %v1424, %v1428
    %v1430 = vlaneseq
    %v1431 = vshrl.u32 %v1430, 7
    %v1432 = vsub.s32 1, %v1431
    %v1433 = vrot.slane %v1424, %v1432
    %v1434 = vlaneseq
    %v1435 = vshrl.u32 %v1434, 7
    %v1436 = vsub.s32 2, %v1435
    %v1437 = vrot.slane %v1424, %v1436
    %v1438 = vlaneseq
    %v1439 = vshrl.u32 %v1438, 7
    %v1440 = vsub.s32 3, %v1439
    %v1441 = vrot.slane %v1424, %v1440
    %1446 = vmatprep.subr.mxu0 %v221
    %1447 = vmatpush1.msra.mxu0 %v220
    %1448 = vmatprep.subr.mxu0 %v225
    %1449 = vmatpush1.msra.mxu0 %v224
    %1450 = vmatprep.subr.mxu0 %v229
    %1451 = vmatpush1.msra.mxu0 %v228
    %1452 = vmatprep.subr.mxu0 %v233
    %1453 = vmatpush1.msra.mxu0 %v232
    %1454 = vmatprep.subr.mxu0 %v237
    %1455 = vmatpush1.msra.mxu0 %v236
    %1456 = vmatprep.subr.mxu0 %v241
    %1457 = vmatpush1.msra.mxu0 %v240
    %1458 = vmatprep.subr.mxu0 %v245
    %1459 = vmatpush1.msra.mxu0 %v244
    %1460 = vmatprep.subr.mxu0 %v249
    %1461 = vmatpush1.msra.mxu0 %v248
    %1462 = vmatprep.subr.mxu0 %v253
    %1463 = vmatpush1.msra.mxu0 %v252
    %1464 = vmatprep.subr.mxu0 %v257
    %1465 = vmatpush1.msra.mxu0 %v256
    %1466 = vmatprep.subr.mxu0 %v261
    %1467 = vmatpush1.msra.mxu0 %v260
    %1468 = vmatprep.subr.mxu0 %v265
    %1469 = vmatpush1.msra.mxu0 %v264
    %1470 = vmatprep.subr.mxu0 %v269
    %1471 = vmatpush1.msra.mxu0 %v268
    %1472 = vmatprep.subr.mxu0 %v273
    %1473 = vmatpush1.msra.mxu0 %v272
    %1474 = vmatprep.subr.mxu0 %v277
    %1475 = vmatpush1.msra.mxu0 %v276
    %1476 = vmatprep.subr.mxu0 %v281
    %1477 = vmatpush1.msra.mxu0 %v280
    %1478 = vmatprep.subr.mxu0 0.0
    %1479 = vmatpush1.msra.mxu0 0.0
    %1480 = vmatprep.subr.mxu0 0.0
    %1481 = vmatpush1.msra.mxu0 0.0
    %1482 = vmatprep.subr.mxu0 0.0
    %1483 = vmatpush1.msra.mxu0 0.0
    %1484 = vmatprep.subr.mxu0 0.0
    %1485 = vmatpush1.msra.mxu0 0.0
    %1486 = vmatprep.subr.mxu0 0.0
    %1487 = vmatpush1.msra.mxu0 0.0
    %1488 = vmatprep.subr.mxu0 0.0
    %1489 = vmatpush1.msra.mxu0 0.0
    %1490 = vmatprep.subr.mxu0 0.0
    %1491 = vmatpush1.msra.mxu0 0.0
    %1492 = vmatprep.subr.mxu0 0.0
    %1493 = vmatpush1.msra.mxu0 0.0
    %1494 = vmatprep.subr.mxu0 0.0
    %1495 = vmatpush1.msra.mxu0 0.0
    %1496 = vmatprep.subr.mxu0 0.0
    %1497 = vmatpush1.msra.mxu0 0.0
    %1498 = vmatprep.subr.mxu0 0.0
    %1499 = vmatpush1.msra.mxu0 0.0
    %1500 = vmatprep.subr.mxu0 0.0
    %1501 = vmatpush1.msra.mxu0 0.0
    %1502 = vmatprep.subr.mxu0 0.0
    %1503 = vmatpush1.msra.mxu0 0.0
    %1504 = vmatprep.subr.mxu0 0.0
    %1505 = vmatpush1.msra.mxu0 0.0
    %1506 = vmatprep.subr.mxu0 0.0
    %1507 = vmatpush1.msra.mxu0 0.0
    %1508 = vmatprep.subr.mxu0 0.0
    %1509 = vmatpush1.msra.mxu0 0.0
    %1510 = vmatprep.mubr.f32.mxu0 0.0
    %1511 = vmatmul.mubr.f32.gmra.mrb[0].mxu0 %v1421
    %v1512 = vpop.f32.mrb[0].mxu0
    %v1513 = vadd.f32 %v1429, %v1512
    %v1514 = vpop.f32.mrb[0].mxu0
    %v1515 = vadd.f32 %v1433, %v1514
    %1516 = vdwg.mxu0
    %1517 = vmatprep.subr.mxu0 %v223
    %1518 = vmatpush1.msra.mxu0 %v222
    %1519 = vmatprep.subr.mxu0 %v227
    %1520 = vmatpush1.msra.mxu0 %v226
    %1521 = vmatprep.subr.mxu0 %v231
    %1522 = vmatpush1.msra.mxu0 %v230
    %1523 = vmatprep.subr.mxu0 %v235
    %1524 = vmatpush1.msra.mxu0 %v234
    %1525 = vmatprep.subr.mxu0 %v239
    %1526 = vmatpush1.msra.mxu0 %v238
    %1527 = vmatprep.subr.mxu0 %v243
    %1528 = vmatpush1.msra.mxu0 %v242
    %1529 = vmatprep.subr.mxu0 %v247
    %1530 = vmatpush1.msra.mxu0 %v246
    %1531 = vmatprep.subr.mxu0 %v251
    %1532 = vmatpush1.msra.mxu0 %v250
    %1533 = vmatprep.subr.mxu0 %v255
    %1534 = vmatpush1.msra.mxu0 %v254
    %1535 = vmatprep.subr.mxu0 %v259
    %1536 = vmatpush1.msra.mxu0 %v258
    %1537 = vmatprep.subr.mxu0 %v263
    %1538 = vmatpush1.msra.mxu0 %v262
    %1539 = vmatprep.subr.mxu0 %v267
    %1540 = vmatpush1.msra.mxu0 %v266
    %1541 = vmatprep.subr.mxu0 %v271
    %1542 = vmatpush1.msra.mxu0 %v270
    %1543 = vmatprep.subr.mxu0 %v275
    %1544 = vmatpush1.msra.mxu0 %v274
    %1545 = vmatprep.subr.mxu0 %v279
    %1546 = vmatpush1.msra.mxu0 %v278
    %1547 = vmatprep.subr.mxu0 %v283
    %1548 = vmatpush1.msra.mxu0 %v282
    %1549 = vmatprep.subr.mxu0 0.0
    %1550 = vmatpush1.msra.mxu0 0.0
    %1551 = vmatprep.subr.mxu0 0.0
    %1552 = vmatpush1.msra.mxu0 0.0
    %1553 = vmatprep.subr.mxu0 0.0
    %1554 = vmatpush1.msra.mxu0 0.0
    %1555 = vmatprep.subr.mxu0 0.0
    %1556 = vmatpush1.msra.mxu0 0.0
    %1557 = vmatprep.subr.mxu0 0.0
    %1558 = vmatpush1.msra.mxu0 0.0
    %1559 = vmatprep.subr.mxu0 0.0
    %1560 = vmatpush1.msra.mxu0 0.0
    %1561 = vmatprep.subr.mxu0 0.0
    %1562 = vmatpush1.msra.mxu0 0.0
    %1563 = vmatprep.subr.mxu0 0.0
    %1564 = vmatpush1.msra.mxu0 0.0
    %1565 = vmatprep.subr.mxu0 0.0
    %1566 = vmatpush1.msra.mxu0 0.0
    %1567 = vmatprep.subr.mxu0 0.0
    %1568 = vmatpush1.msra.mxu0 0.0
    %1569 = vmatprep.subr.mxu0 0.0
    %1570 = vmatpush1.msra.mxu0 0.0
    %1571 = vmatprep.subr.mxu0 0.0
    %1572 = vmatpush1.msra.mxu0 0.0
    %1573 = vmatprep.subr.mxu0 0.0
    %1574 = vmatpush1.msra.mxu0 0.0
    %1575 = vmatprep.subr.mxu0 0.0
    %1576 = vmatpush1.msra.mxu0 0.0
    %1577 = vmatprep.subr.mxu0 0.0
    %1578 = vmatpush1.msra.mxu0 0.0
    %1579 = vmatprep.subr.mxu0 0.0
    %1580 = vmatpush1.msra.mxu0 0.0
    %1581 = vmatprep.mubr.f32.mxu0 0.0
    %1582 = vmatmul.mubr.f32.gmra.mrb[0].mxu0 %v1421
    %v1583 = vpop.f32.mrb[0].mxu0
    %v1584 = vadd.f32 %v1437, %v1583
    %v1585 = vpop.f32.mrb[0].mxu0
    %v1586 = vadd.f32 %v1441, %v1585
    %1587 = vdwg.mxu0
    %v1588 = vxor.u32 %v1513, 2147483648
    %v1589 = vmul.f32 %v1588, 1.442695
    %v1590 = vpow.pop %v1589
    %v1591 = vadd.f32 %v1590, 1.0
    %v1592 = vrcp.pop %v1591
    %v1593 = vmul.f32 1.0, %v1592
    %v1594 = vxor.u32 %v1515, 2147483648
    %v1595 = vmul.f32 %v1594, 1.442695
    %v1596 = vpow.pop %v1595
    %v1597 = vadd.f32 %v1596, 1.0
    %v1598 = vrcp.pop %v1597
    %v1599 = vmul.f32 1.0, %v1598
    %v1600 = vtanh.pop %v1584
    %v1601 = vxor.u32 %v1586, 2147483648
    %v1602 = vmul.f32 %v1601, 1.442695
    %v1603 = vpow.pop %v1602
    %v1604 = vadd.f32 %v1603, 1.0
    %v1605 = vrcp.pop %v1604
    %v1606 = vmul.f32 1.0, %v1605
    %v1607 = vmul.f32 %v1599, %v1419
    %v1608 = vmul.f32 %v1593, %v1600
    %v1609 = vadd.f32 %v1607, %v1608
    %v1610 = vtanh.pop %v1609
    %v1611 = vmul.f32 %v1606, %v1610
    %1612 = vst [vmem:[#allocation3 + $0x6] sm:$0x1] %v1611
    %s1613 = scalar_lea.vmem [#allocation2], 7
    %v1614 = vld [vmem:[%s1613] ss:$8 sm:$0xf]
    %v1616 = vlaneseq
    %v1617 = vshrl.u32 %v1616, 7
    %v1618 = vsub.s32 0, %v1617
    %v1619 = vrot.slane %v1614, %v1618
    %v1620 = vlaneseq
    %v1621 = vshrl.u32 %v1620, 7
    %v1622 = vsub.s32 1, %v1621
    %v1623 = vrot.slane %v1614, %v1622
    %v1624 = vlaneseq
    %v1625 = vshrl.u32 %v1624, 7
    %v1626 = vsub.s32 2, %v1625
    %v1627 = vrot.slane %v1614, %v1626
    %v1628 = vlaneseq
    %v1629 = vshrl.u32 %v1628, 7
    %v1630 = vsub.s32 3, %v1629
    %v1631 = vrot.slane %v1614, %v1630
    %1636 = vmatprep.subr.mxu0 %v221
    %1637 = vmatpush1.msra.mxu0 %v220
    %1638 = vmatprep.subr.mxu0 %v225
    %1639 = vmatpush1.msra.mxu0 %v224
    %1640 = vmatprep.subr.mxu0 %v229
    %1641 = vmatpush1.msra.mxu0 %v228
    %1642 = vmatprep.subr.mxu0 %v233
    %1643 = vmatpush1.msra.mxu0 %v232
    %1644 = vmatprep.subr.mxu0 %v237
    %1645 = vmatpush1.msra.mxu0 %v236
    %1646 = vmatprep.subr.mxu0 %v241
    %1647 = vmatpush1.msra.mxu0 %v240
    %1648 = vmatprep.subr.mxu0 %v245
    %1649 = vmatpush1.msra.mxu0 %v244
    %1650 = vmatprep.subr.mxu0 %v249
    %1651 = vmatpush1.msra.mxu0 %v248
    %1652 = vmatprep.subr.mxu0 %v253
    %1653 = vmatpush1.msra.mxu0 %v252
    %1654 = vmatprep.subr.mxu0 %v257
    %1655 = vmatpush1.msra.mxu0 %v256
    %1656 = vmatprep.subr.mxu0 %v261
    %1657 = vmatpush1.msra.mxu0 %v260
    %1658 = vmatprep.subr.mxu0 %v265
    %1659 = vmatpush1.msra.mxu0 %v264
    %1660 = vmatprep.subr.mxu0 %v269
    %1661 = vmatpush1.msra.mxu0 %v268
    %1662 = vmatprep.subr.mxu0 %v273
    %1663 = vmatpush1.msra.mxu0 %v272
    %1664 = vmatprep.subr.mxu0 %v277
    %1665 = vmatpush1.msra.mxu0 %v276
    %1666 = vmatprep.subr.mxu0 %v281
    %1667 = vmatpush1.msra.mxu0 %v280
    %1668 = vmatprep.subr.mxu0 0.0
    %1669 = vmatpush1.msra.mxu0 0.0
    %1670 = vmatprep.subr.mxu0 0.0
    %1671 = vmatpush1.msra.mxu0 0.0
    %1672 = vmatprep.subr.mxu0 0.0
    %1673 = vmatpush1.msra.mxu0 0.0
    %1674 = vmatprep.subr.mxu0 0.0
    %1675 = vmatpush1.msra.mxu0 0.0
    %1676 = vmatprep.subr.mxu0 0.0
    %1677 = vmatpush1.msra.mxu0 0.0
    %1678 = vmatprep.subr.mxu0 0.0
    %1679 = vmatpush1.msra.mxu0 0.0
    %1680 = vmatprep.subr.mxu0 0.0
    %1681 = vmatpush1.msra.mxu0 0.0
    %1682 = vmatprep.subr.mxu0 0.0
    %1683 = vmatpush1.msra.mxu0 0.0
    %1684 = vmatprep.subr.mxu0 0.0
    %1685 = vmatpush1.msra.mxu0 0.0
    %1686 = vmatprep.subr.mxu0 0.0
    %1687 = vmatpush1.msra.mxu0 0.0
    %1688 = vmatprep.subr.mxu0 0.0
    %1689 = vmatpush1.msra.mxu0 0.0
    %1690 = vmatprep.subr.mxu0 0.0
    %1691 = vmatpush1.msra.mxu0 0.0
    %1692 = vmatprep.subr.mxu0 0.0
    %1693 = vmatpush1.msra.mxu0 0.0
    %1694 = vmatprep.subr.mxu0 0.0
    %1695 = vmatpush1.msra.mxu0 0.0
    %1696 = vmatprep.subr.mxu0 0.0
    %1697 = vmatpush1.msra.mxu0 0.0
    %1698 = vmatprep.subr.mxu0 0.0
    %1699 = vmatpush1.msra.mxu0 0.0
    %1700 = vmatprep.mubr.f32.mxu0 0.0
    %1701 = vmatmul.mubr.f32.gmra.mrb[0].mxu0 %v1611
    %v1702 = vpop.f32.mrb[0].mxu0
    %v1703 = vadd.f32 %v1619, %v1702
    %v1704 = vpop.f32.mrb[0].mxu0
    %v1705 = vadd.f32 %v1623, %v1704
    %1706 = vdwg.mxu0
    %1707 = vmatprep.subr.mxu0 %v223
    %1708 = vmatpush1.msra.mxu0 %v222
    %1709 = vmatprep.subr.mxu0 %v227
    %1710 = vmatpush1.msra.mxu0 %v226
    %1711 = vmatprep.subr.mxu0 %v231
    %1712 = vmatpush1.msra.mxu0 %v230
    %1713 = vmatprep.subr.mxu0 %v235
    %1714 = vmatpush1.msra.mxu0 %v234
    %1715 = vmatprep.subr.mxu0 %v239
    %1716 = vmatpush1.msra.mxu0 %v238
    %1717 = vmatprep.subr.mxu0 %v243
    %1718 = vmatpush1.msra.mxu0 %v242
    %1719 = vmatprep.subr.mxu0 %v247
    %1720 = vmatpush1.msra.mxu0 %v246
    %1721 = vmatprep.subr.mxu0 %v251
    %1722 = vmatpush1.msra.mxu0 %v250
    %1723 = vmatprep.subr.mxu0 %v255
    %1724 = vmatpush1.msra.mxu0 %v254
    %1725 = vmatprep.subr.mxu0 %v259
    %1726 = vmatpush1.msra.mxu0 %v258
    %1727 = vmatprep.subr.mxu0 %v263
    %1728 = vmatpush1.msra.mxu0 %v262
    %1729 = vmatprep.subr.mxu0 %v267
    %1730 = vmatpush1.msra.mxu0 %v266
    %1731 = vmatprep.subr.mxu0 %v271
    %1732 = vmatpush1.msra.mxu0 %v270
    %1733 = vmatprep.subr.mxu0 %v275
    %1734 = vmatpush1.msra.mxu0 %v274
    %1735 = vmatprep.subr.mxu0 %v279
    %1736 = vmatpush1.msra.mxu0 %v278
    %1737 = vmatprep.subr.mxu0 %v283
    %1738 = vmatpush1.msra.mxu0 %v282
    %1739 = vmatprep.subr.mxu0 0.0
    %1740 = vmatpush1.msra.mxu0 0.0
    %1741 = vmatprep.subr.mxu0 0.0
    %1742 = vmatpush1.msra.mxu0 0.0
    %1743 = vmatprep.subr.mxu0 0.0
    %1744 = vmatpush1.msra.mxu0 0.0
    %1745 = vmatprep.subr.mxu0 0.0
    %1746 = vmatpush1.msra.mxu0 0.0
    %1747 = vmatprep.subr.mxu0 0.0
    %1748 = vmatpush1.msra.mxu0 0.0
    %1749 = vmatprep.subr.mxu0 0.0
    %1750 = vmatpush1.msra.mxu0 0.0
    %1751 = vmatprep.subr.mxu0 0.0
    %1752 = vmatpush1.msra.mxu0 0.0
    %1753 = vmatprep.subr.mxu0 0.0
    %1754 = vmatpush1.msra.mxu0 0.0
    %1755 = vmatprep.subr.mxu0 0.0
    %1756 = vmatpush1.msra.mxu0 0.0
    %1757 = vmatprep.subr.mxu0 0.0
    %1758 = vmatpush1.msra.mxu0 0.0
    %1759 = vmatprep.subr.mxu0 0.0
    %1760 = vmatpush1.msra.mxu0 0.0
    %1761 = vmatprep.subr.mxu0 0.0
    %1762 = vmatpush1.msra.mxu0 0.0
    %1763 = vmatprep.subr.mxu0 0.0
    %1764 = vmatpush1.msra.mxu0 0.0
    %1765 = vmatprep.subr.mxu0 0.0
    %1766 = vmatpush1.msra.mxu0 0.0
    %1767 = vmatprep.subr.mxu0 0.0
    %1768 = vmatpush1.msra.mxu0 0.0
    %1769 = vmatprep.subr.mxu0 0.0
    %1770 = vmatpush1.msra.mxu0 0.0
    %1771 = vmatprep.mubr.f32.mxu0 0.0
    %1772 = vmatmul.mubr.f32.gmra.mrb[0].mxu0 %v1611
    %v1773 = vpop.f32.mrb[0].mxu0
    %v1774 = vadd.f32 %v1627, %v1773
    %v1775 = vpop.f32.mrb[0].mxu0
    %v1776 = vadd.f32 %v1631, %v1775
    %1777 = vdwg.mxu0
    %v1778 = vxor.u32 %v1703, 2147483648
    %v1779 = vmul.f32 %v1778, 1.442695
    %v1780 = vpow.pop %v1779
    %v1781 = vadd.f32 %v1780, 1.0
    %v1782 = vrcp.pop %v1781
    %v1783 = vmul.f32 1.0, %v1782
    %v1784 = vxor.u32 %v1705, 2147483648
    %v1785 = vmul.f32 %v1784, 1.442695
    %v1786 = vpow.pop %v1785
    %v1787 = vadd.f32 %v1786, 1.0
    %v1788 = vrcp.pop %v1787
    %v1789 = vmul.f32 1.0, %v1788
    %v1790 = vtanh.pop %v1774
    %v1791 = vxor.u32 %v1776, 2147483648
    %v1792 = vmul.f32 %v1791, 1.442695
    %v1793 = vpow.pop %v1792
    %v1794 = vadd.f32 %v1793, 1.0
    %v1795 = vrcp.pop %v1794
    %v1796 = vmul.f32 1.0, %v1795
    %v1797 = vmul.f32 %v1789, %v1609
    %v1798 = vmul.f32 %v1783, %v1790
    %v1799 = vadd.f32 %v1797, %v1798
    %v1800 = vtanh.pop %v1799
    %v1801 = vmul.f32 %v1796, %v1800
    %1802 = vst [vmem:[#allocation3 + $0x7] sm:$0x1] %v1801
    %v1803 = vld [vmem:[#allocation3] sm:$0xff]
    %v1804 = vld [vmem:[%s4] sm:$0xff]
    %v1805 = vld [vmem:[%s4 + $0x8] sm:$0xff]
    %v1806 = vld [vmem:[%s4 + $0x10] sm:$0xff]
    %v1807 = vld [vmem:[%s4 + $0x18] sm:$0xff]
    %v1808 = vld [vmem:[%s4 + $0x20] sm:$0xff]
    %v1809 = vld [vmem:[%s4 + $0x28] sm:$0xff]
    %v1810 = vld [vmem:[%s4 + $0x30] sm:$0xff]
    %v1811 = vld [vmem:[%s4 + $0x38] sm:$0xff]
    %v1812 = vld [vmem:[%s4 + $0x40] sm:$0xff]
    %v1813 = vld [vmem:[%s4 + $0x48] sm:$0xff]
    %v1814 = vld [vmem:[%s4 + $0x50] sm:$0xff]
    %v1815 = vld [vmem:[%s4 + $0x58] sm:$0xff]
    %v1816 = vld [vmem:[%s4 + $0x60] sm:$0xff]
    %v1817 = vld [vmem:[%s4 + $0x68] sm:$0xff]
    %v1818 = vld [vmem:[%s4 + $0x70] sm:$0xff]
    %v1819 = vld [vmem:[%s4 + $0x78] sm:$0xff]
    %v1820 = vld [vmem:[#allocation4] sm:$0x1]
    %v1822 = vlaneseq
    %v1823 = vshrl.u32 %v1822, 7
    %v1824 = vsub.s32 0, %v1823
    %v1825 = vrot.slane %v1820, %v1824
    %1827 = vmatprep.subr.mxu0 0.0
    %1828 = vmatpush1.msra.mxu0 %v1804
    %1829 = vmatprep.subr.mxu0 0.0
    %1830 = vmatpush1.msra.mxu0 %v1805
    %1831 = vmatprep.subr.mxu0 0.0
    %1832 = vmatpush1.msra.mxu0 %v1806
    %1833 = vmatprep.subr.mxu0 0.0
    %1834 = vmatpush1.msra.mxu0 %v1807
    %1835 = vmatprep.subr.mxu0 0.0
    %1836 = vmatpush1.msra.mxu0 %v1808
    %1837 = vmatprep.subr.mxu0 0.0
    %1838 = vmatpush1.msra.mxu0 %v1809
    %1839 = vmatprep.subr.mxu0 0.0
    %1840 = vmatpush1.msra.mxu0 %v1810
    %1841 = vmatprep.subr.mxu0 0.0
    %1842 = vmatpush1.msra.mxu0 %v1811
    %1843 = vmatprep.subr.mxu0 0.0
    %1844 = vmatpush1.msra.mxu0 %v1812
    %1845 = vmatprep.subr.mxu0 0.0
    %1846 = vmatpush1.msra.mxu0 %v1813
    %1847 = vmatprep.subr.mxu0 0.0
    %1848 = vmatpush1.msra.mxu0 %v1814
    %1849 = vmatprep.subr.mxu0 0.0
    %1850 = vmatpush1.msra.mxu0 %v1815
    %1851 = vmatprep.subr.mxu0 0.0
    %1852 = vmatpush1.msra.mxu0 %v1816
    %1853 = vmatprep.subr.mxu0 0.0
    %1854 = vmatpush1.msra.mxu0 %v1817
    %1855 = vmatprep.subr.mxu0 0.0
    %1856 = vmatpush1.msra.mxu0 %v1818
    %1857 = vmatprep.subr.mxu0 0.0
    %1858 = vmatpush1.msra.mxu0 %v1819
    %1859 = vmatprep.subr.mxu0 0.0
    %1860 = vmatpush1.msra.mxu0 0.0
    %1861 = vmatprep.subr.mxu0 0.0
    %1862 = vmatpush1.msra.mxu0 0.0
    %1863 = vmatprep.subr.mxu0 0.0
    %1864 = vmatpush1.msra.mxu0 0.0
    %1865 = vmatprep.subr.mxu0 0.0
    %1866 = vmatpush1.msra.mxu0 0.0
    %1867 = vmatprep.subr.mxu0 0.0
    %1868 = vmatpush1.msra.mxu0 0.0
    %1869 = vmatprep.subr.mxu0 0.0
    %1870 = vmatpush1.msra.mxu0 0.0
    %1871 = vmatprep.subr.mxu0 0.0
    %1872 = vmatpush1.msra.mxu0 0.0
    %1873 = vmatprep.subr.mxu0 0.0
    %1874 = vmatpush1.msra.mxu0 0.0
    %1875 = vmatprep.subr.mxu0 0.0
    %1876 = vmatpush1.msra.mxu0 0.0
    %1877 = vmatprep.subr.mxu0 0.0
    %1878 = vmatpush1.msra.mxu0 0.0
    %1879 = vmatprep.subr.mxu0 0.0
    %1880 = vmatpush1.msra.mxu0 0.0
    %1881 = vmatprep.subr.mxu0 0.0
    %1882 = vmatpush1.msra.mxu0 0.0
    %1883 = vmatprep.subr.mxu0 0.0
    %1884 = vmatpush1.msra.mxu0 0.0
    %1885 = vmatprep.subr.mxu0 0.0
    %1886 = vmatpush1.msra.mxu0 0.0
    %1887 = vmatprep.subr.mxu0 0.0
    %1888 = vmatpush1.msra.mxu0 0.0
    %1889 = vmatprep.subr.mxu0 0.0
    %1890 = vmatpush1.msra.mxu0 0.0
    %1891 = vmatprep.mubr.f32.mxu0 0.0
    %1892 = vmatmul.mubr.f32.gmra.mrb[0].mxu0 %v1803
    %v1893 = vpop.f32.mrb[0].mxu0
    %v1894 = vadd.f32 %v1825, %v1893
    %v1895 = vpop.f32.mrb[0].mxu0
    %1896 = vdwg.mxu0
    %vm1897 = vcmask 7168
    %1898 = vst.msk [vmem:[%s6] sm:$0xff] %vm1897, %v1894
    // Predicated region
    $region30: #{tpu_custom_call.1} parent=1 // pred_check
      _
    $region31: #{tpu_custom_call.1} parent=1 // pred_check_branch
      %1900 = sbr.rel (0) target = $region33
    $region32: #{tpu_custom_call.1} parent=1 // pred_region
      _
    $region33: #{tpu_custom_call.1} parent=1 // pred_fallthru
      _
    // Predicated region
    $region34: #{tpu_custom_call.1} parent=1 // pred_check
      _
    $region35: #{tpu_custom_call.1} parent=1 // pred_check_branch
      %1902 = sbr.rel (0) target = $region37
    $region36: #{tpu_custom_call.1} parent=1 // pred_region
      _
    $region37: #{tpu_custom_call.1} parent=1 // pred_fallthru
      _
    %1903 = vsyncpa [#allocation6], 1

</llo_original>
